<compile_context>
chip_gen: v6e
topology: v6e:2x2x1
jax: 0.10.0
libtpu: 0.0.40
codegen_flags: <defaults>
</compile_context>

<pallas_src>
import functools

import jax
import jax.numpy as jnp
from jax.experimental import pallas as pl
from jax.experimental.pallas import tpu as pltpu


def _round_up(x, m):
    return ((x + m - 1) // m) * m


# ----------------------------------------------------------------------------
# Pallas kernel: full Critic forward for ONE (B_tile * S, C) slab per grid step.
# ----------------------------------------------------------------------------
def critic_kernel(x_ref, pool_ref, w1_ref, b1_ref, w2_ref, b2_ref,
                  w3_ref, b3_ref, w4_ref, b4_ref, alpha_ref, out_ref,
                  *, seq_len):
    M = x_ref.shape[0]                         # B_tile * S (static)
    S = seq_len

    # Sequence-boundary masks, computed ONCE (hoisted out of the layers).
    pos = jax.lax.broadcasted_iota(jnp.int32, (M, 1), 0) % S
    not_first = pos != 0                       # row has a valid previous row
    not_last = pos != (S - 1)                  # row has a valid next row

    def conv_bn_prelu(h, w_ref, b_ref, alpha):
        # h: (M, Cin) f32; w_ref: (3*Cin, Cout) bf16 (BN folded); b_ref: (1, Cout).
        zeros = jnp.zeros_like(h)
        h_prev = jnp.where(not_first, pltpu.roll(h, shift=1, axis=0), zeros)
        h_next = jnp.where(not_last, pltpu.roll(h, shift=M - 1, axis=0), zeros)
        # Conv1d(k=3, pad=1) as a single fused-tap matmul on the MXU.
        h_cat = jnp.concatenate([h_prev, h, h_next], axis=1)      # (M, 3*Cin)
        y = jnp.dot(h_cat.astype(jnp.bfloat16), w_ref[...],
                    preferred_element_type=jnp.float32) + b_ref[...]
        # PReLU (single shared parameter). Dropout = identity (eval mode).
        return jnp.where(y >= 0.0, y, alpha * y)

    h = x_ref[...]                                               # (M, Cin_pad) f32
    h = conv_bn_prelu(h, w1_ref, b1_ref, alpha_ref[0])           # (M, 128)
    h = conv_bn_prelu(h, w2_ref, b2_ref, alpha_ref[1])           # (M, 128)
    h = conv_bn_prelu(h, w3_ref, b3_ref, alpha_ref[2])           # (M, 256)
    h = conv_bn_prelu(h, w4_ref, b4_ref, alpha_ref[3])           # (M, 512)

    # AdaptiveAvgPool1d(1): per-batch-element mean over its S rows as a matmul.
    out_ref[...] = jnp.dot(pool_ref[...], h,
                           preferred_element_type=jnp.float32)   # (B_tile, 512)


# ----------------------------------------------------------------------------
# Wrapper
# ----------------------------------------------------------------------------
def critic_forward(x_target, x_condition, params, *, batch_tile=None):
    (w1, b1, w2, b2, w3, b3, w4, b4, alphas, fcw, fcb) = params

    # Glue: concatenate features (PyTorch cat on dim=2); keep channels-last.
    x = jnp.concatenate([x_target, x_condition], axis=2).astype(jnp.float32)
    B, S, C_in = x.shape

    # ---- Lane padding of channel dims (zero channels are mathematically inert).
    c_pad = _round_up(C_in, 128)
    co1_pad = _round_up(w1.shape[2], 128)                        # 64 -> 128
    w1p = jnp.pad(w1, ((0, 0), (0, c_pad - C_in), (0, co1_pad - w1.shape[2])))
    b1p = jnp.pad(b1, ((0, 0), (0, co1_pad - b1.shape[1])))
    w2p = jnp.pad(w2, ((0, 0), (0, co1_pad - w2.shape[1]), (0, 0)))
    ws = [w1p, w2p, w3, w4]
    bs = [b1p, b2, b3, b4]
    # Fuse the 3 conv taps into a single (3*Cin, Cout) bf16 matrix per layer.
    wf = [w.reshape(-1, w.shape[2]).astype(jnp.bfloat16) for w in ws]
    bf = [b.astype(jnp.float32) for b in bs]

    # ---- Batch tiling: fuse batch into the matmul M dimension.
    if batch_tile is None:
        target = max(1, 256 // max(S, 1))       # target M ~ 256 (MXU-sized)
        if target >= B:
            batch_tile = B                      # single grid step
        else:
            batch_tile = max(8, (target // 8) * 8)
    n_tiles = pl.cdiv(B, batch_tile)
    b_pad = n_tiles * batch_tile

    if b_pad != B:
        x = jnp.pad(x, ((0, b_pad - B), (0, 0), (0, 0)))
    if c_pad != C_in:
        x = jnp.pad(x, ((0, 0), (0, 0), (0, c_pad - C_in)))
    x2d = x.reshape(b_pad * S, c_pad)                            # fused (B*S, C)

    M = batch_tile * S
    # Per-batch-element mean over S rows, expressed as a (B_tile, M) matrix.
    pool_mat = jnp.repeat(jnp.eye(batch_tile, dtype=jnp.float32), S, axis=1) / S

    def invariant(arr):
        nd = arr.ndim
        return pl.BlockSpec(arr.shape, lambda b, nd=nd: (0,) * nd)

    kernel = functools.partial(critic_kernel, seq_len=S)
    pooled = pl.pallas_call(
        kernel,
        out_shape=jax.ShapeDtypeStruct((b_pad, 512), jnp.float32),
        grid_spec=pltpu.PrefetchScalarGridSpec(
            num_scalar_prefetch=0,
            grid=(n_tiles,),
            in_specs=[
                pl.BlockSpec((M, c_pad), lambda b: (b, 0)),       # x slab
                invariant(pool_mat),
                invariant(wf[0]), invariant(bf[0]),
                invariant(wf[1]), invariant(bf[1]),
                invariant(wf[2]), invariant(bf[2]),
                invariant(wf[3]), invariant(bf[3]),
                pl.BlockSpec(memory_space=pltpu.MemorySpace.SMEM),  # PReLU alphas
            ],
            out_specs=pl.BlockSpec((batch_tile, 512), lambda b: (b, 0)),
        ),
        compiler_params=pltpu.CompilerParams(
            dimension_semantics=("parallel",)),
    )(x2d, pool_mat, wf[0], bf[0], wf[1], bf[1], wf[2], bf[2],
      wf[3], bf[3], alphas.astype(jnp.float32))

    # Final Linear(512, 1) on the lane-dense pooled activations (plain XLA).
    return pooled[:B] @ fcw.T + fcb


# ----------------------------------------------------------------------------
# Deterministic parameter construction (BN folded into conv, logical shapes).
# ----------------------------------------------------------------------------
def make_params(key, total_input_dim):
    dims = [total_input_dim, 64, 128, 256, 512]
    eps = 1e-5
    params = []
    keys = iter(jax.random.split(key, 40))
    for i in range(4):
        cin, cout = dims[i], dims[i + 1]
        w = jax.random.normal(next(keys), (3, cin, cout), jnp.float32) * 0.1
        cb = jax.random.normal(next(keys), (cout,), jnp.float32) * 0.1
        gamma = 1.0 + 0.1 * jax.random.normal(next(keys), (cout,), jnp.float32)
        beta = 0.1 * jax.random.normal(next(keys), (cout,), jnp.float32)
        rmean = 0.1 * jax.random.normal(next(keys), (cout,), jnp.float32)
        rvar = 0.5 + jnp.abs(jax.random.normal(next(keys), (cout,), jnp.float32)) * 0.5
        scale = gamma / jnp.sqrt(rvar + eps)
        w_folded = w * scale[None, None, :]
        b_folded = ((cb - rmean) * scale + beta)[None, :]        # (1, Cout)
        params += [w_folded, b_folded]
    alphas = jnp.full((4,), 0.25, jnp.float32)                   # PReLU defaults
    fcw = jax.random.normal(next(keys), (1, 512), jnp.float32) * 0.05
    fcb = jax.random.normal(next(keys), (1, 1), jnp.float32) * 0.05
    params += [alphas, fcw, fcb]
    return tuple(params)


# ----------------------------------------------------------------------------
# Pure-JAX reference (same math / same bf16 matmul precision) for a check.
# ----------------------------------------------------------------------------
def reference_forward(x_target, x_condition, params):
    (w1, b1, w2, b2, w3, b3, w4, b4, alphas, fcw, fcb) = params
    x = jnp.concatenate([x_target, x_condition], axis=2).astype(jnp.float32)

    def layer(h, w, b, a):
        hp = jnp.pad(h, ((0, 0), (1, 1), (0, 0))).astype(jnp.bfloat16)
        wb = w.astype(jnp.bfloat16)
        y = (jnp.einsum("bsc,cd->bsd", hp[:, :-2], wb[0],
                        preferred_element_type=jnp.float32)
             + jnp.einsum("bsc,cd->bsd", hp[:, 1:-1], wb[1],
                          preferred_element_type=jnp.float32)
             + jnp.einsum("bsc,cd->bsd", hp[:, 2:], wb[2],
                          preferred_element_type=jnp.float32)
             + b[None])
        return jnp.where(y >= 0, y, a * y)

    h = layer(x, w1, b1, alphas[0])
    h = layer(h, w2, b2, alphas[1])
    h = layer(h, w3, b3, alphas[2])
    h = layer(h, w4, b4, alphas[3])
    pooled = jnp.mean(h, axis=1)                                 # (B, 512)
    return pooled @ fcw.T + fcb                                  # (B, 1)


if __name__ == "__main__":
    # Small shapes: batch=2, seq_len=8, target_dim=6, condition_dim=10.
    B, S, target_dim, condition_dim = 2, 8, 6, 10
    key = jax.random.PRNGKey(0)
    k_t, k_c, k_p = jax.random.split(key, 3)
    x_target = jax.random.normal(k_t, (B, S, target_dim), jnp.float32)
    x_condition = jax.random.normal(k_c, (B, S, condition_dim), jnp.float32)
    params = make_params(k_p, target_dim + condition_dim)

    score = critic_forward(x_target, x_condition, params)
    score = jax.block_until_ready(score)

    ref = reference_forward(x_target, x_condition, params)
    assert score.shape == (B, 1)
    assert jnp.allclose(score, ref, atol=5e-3, rtol=5e-3), (score, ref)
    print("KERNEL_OK")
</pallas_src>

<mosaic_0001>
module attributes {stable_mosaic.version = 11 : i64} {
  func.func @critic_kernel(%arg0: i32, %arg1: memref<16x128xf32, #tpu.memory_space<vmem>>, %arg2: memref<2x16xf32, #tpu.memory_space<vmem>>, %arg3: memref<384x128xbf16, #tpu.memory_space<vmem>>, %arg4: memref<1x128xf32, #tpu.memory_space<vmem>>, %arg5: memref<384x128xbf16, #tpu.memory_space<vmem>>, %arg6: memref<1x128xf32, #tpu.memory_space<vmem>>, %arg7: memref<384x256xbf16, #tpu.memory_space<vmem>>, %arg8: memref<1x256xf32, #tpu.memory_space<vmem>>, %arg9: memref<768x512xbf16, #tpu.memory_space<vmem>>, %arg10: memref<1x512xf32, #tpu.memory_space<vmem>>, %arg11: memref<4xf32, #tpu.memory_space<smem>>, %arg12: memref<2x512xf32, #tpu.memory_space<vmem>>) attributes {dimension_semantics = [#tpu.dimension_semantics<parallel>], iteration_bounds = array<i64: 1>, scalar_prefetch = 0 : i64, scratch_operands = 0 : i64, tpu.core_type = #tpu.core_type<tc>, window_params = [{transform_indices = @transform_0, window_bounds = array<i64: 16, 128>}, {pipeline_mode = #tpu.pipeline_mode<synchronous>, transform_indices = @transform_1, window_bounds = array<i64: 2, 16>}, {pipeline_mode = #tpu.pipeline_mode<synchronous>, transform_indices = @transform_2, window_bounds = array<i64: 384, 128>}, {pipeline_mode = #tpu.pipeline_mode<synchronous>, transform_indices = @transform_3, window_bounds = array<i64: 1, 128>}, {pipeline_mode = #tpu.pipeline_mode<synchronous>, transform_indices = @transform_4, window_bounds = array<i64: 384, 128>}, {pipeline_mode = #tpu.pipeline_mode<synchronous>, transform_indices = @transform_5, window_bounds = array<i64: 1, 128>}, {pipeline_mode = #tpu.pipeline_mode<synchronous>, transform_indices = @transform_6, window_bounds = array<i64: 384, 256>}, {pipeline_mode = #tpu.pipeline_mode<synchronous>, transform_indices = @transform_7, window_bounds = array<i64: 1, 256>}, {pipeline_mode = #tpu.pipeline_mode<synchronous>, transform_indices = @transform_8, window_bounds = array<i64: 768, 512>}, {pipeline_mode = #tpu.pipeline_mode<synchronous>, transform_indices = @transform_9, window_bounds = array<i64: 1, 512>}, {transform_indices = @transform_10, window_bounds = array<i64: 4>}, {transform_indices = @transform_11, window_bounds = array<i64: 2, 512>}]} {
    %0 = tpu.iota {dimensions = array<i32: 0>} : vector<16x1xi32>
    %c8_i32 = arith.constant 8 : i32
    %c0_i32 = arith.constant 0 : i32
    %1 = arith.cmpi eq, %c8_i32, %c0_i32 : i32
    %c1_i32 = arith.constant 1 : i32
    %2 = arith.select %1, %c1_i32, %c8_i32 : i32
    %3 = vector.broadcast %2 : i32 to vector<16x1xi32>
    %4 = arith.remsi %0, %3 : vector<16x1xi32>
    %c0_i32_0 = arith.constant 0 : i32
    %5 = vector.broadcast %c0_i32_0 : i32 to vector<16x1xi32>
    %6 = arith.cmpi ne, %4, %5 : vector<16x1xi32>
    %c0_i32_1 = arith.constant 0 : i32
    %7 = vector.broadcast %c0_i32_1 : i32 to vector<16x1xi32>
    %8 = arith.cmpi slt, %4, %7 : vector<16x1xi32>
    %c0_i32_2 = arith.constant 0 : i32
    %9 = arith.cmpi slt, %2, %c0_i32_2 : i32
    %10 = vector.broadcast %9 : i1 to vector<16x1xi1>
    %11 = vector.broadcast %10 : vector<16x1xi1> to vector<16x1xi1>
    %12 = arith.xori %8, %11 : vector<16x1xi1>
    %13 = arith.andi %12, %6 : vector<16x1xi1>
    %14 = vector.broadcast %2 : i32 to vector<16x1xi32>
    %15 = arith.addi %4, %14 : vector<16x1xi32>
    %16 = arith.select %13, %15, %4 : vector<16x1xi1>, vector<16x1xi32>
    %c0_i32_3 = arith.constant 0 : i32
    %17 = vector.broadcast %c0_i32_3 : i32 to vector<16x1xi32>
    %18 = arith.cmpi ne, %16, %17 : vector<16x1xi32>
    %c7_i32 = arith.constant 7 : i32
    %19 = vector.broadcast %c7_i32 : i32 to vector<16x1xi32>
    %20 = arith.cmpi ne, %16, %19 : vector<16x1xi32>
    %c0 = arith.constant 0 : index
    %c0_4 = arith.constant 0 : index
    %21 = vector.load %arg1[%c0, %c0_4] : memref<16x128xf32, #tpu.memory_space<vmem>>, vector<16x128xf32>
    %c0_5 = arith.constant 0 : index
    %22 = memref.load %arg11[%c0_5] : memref<4xf32, #tpu.memory_space<smem>>
    %cst = arith.constant 0.000000e+00 : f32
    %23 = vector.broadcast %cst : f32 to vector<16x128xf32>
    %c1_i32_6 = arith.constant 1 : i32
    %24 = tpu.dynamic_rotate %21 by %c1_i32_6 dim 0 : vector<16x128xf32>, i32 -> vector<16x128xf32>
    %25 = vector.shape_cast %18 : vector<16x1xi1> to vector<16x1xi1>
    %26 = vector.broadcast %25 : vector<16x1xi1> to vector<16x128xi1>
    %27 = arith.select %26, %24, %23 : vector<16x128xi1>, vector<16x128xf32>
    %c15_i32 = arith.constant 15 : i32
    %28 = tpu.dynamic_rotate %21 by %c15_i32 dim 0 : vector<16x128xf32>, i32 -> vector<16x128xf32>
    %29 = vector.shape_cast %20 : vector<16x1xi1> to vector<16x1xi1>
    %30 = vector.broadcast %29 : vector<16x1xi1> to vector<16x128xi1>
    %31 = arith.select %30, %28, %23 : vector<16x128xi1>, vector<16x128xf32>
    %32 = tpu.concatenate %27, %21, %31 in 1 : vector<16x128xf32>, vector<16x128xf32>, vector<16x128xf32> -> vector<16x384xf32>
    %33 = arith.truncf %32 : vector<16x384xf32> to vector<16x384xbf16>
    %c0_7 = arith.constant 0 : index
    %c0_8 = arith.constant 0 : index
    %34 = vector.load %arg3[%c0_7, %c0_8] : memref<384x128xbf16, #tpu.memory_space<vmem>>, vector<384x128xbf16>
    %cst_9 = arith.constant dense<0.000000e+00> : vector<16x128xf32>
    %35 = tpu.matmul %33, %34, %cst_9 {dimension_numbers = #tpu.dot_dimension_numbers<[1], [0], [0], [1], [0, 0, 1, 1], [], []>} : vector<16x384xbf16>, vector<384x128xbf16>, vector<16x128xf32> -> vector<16x128xf32>
    %c0_10 = arith.constant 0 : index
    %c0_11 = arith.constant 0 : index
    %36 = vector.load %arg4[%c0_10, %c0_11] : memref<1x128xf32, #tpu.memory_space<vmem>>, vector<1x128xf32>
    %37 = vector.broadcast %36 : vector<1x128xf32> to vector<16x128xf32>
    %38 = arith.addf %35, %37 : vector<16x128xf32>
    %cst_12 = arith.constant 0.000000e+00 : f32
    %39 = vector.broadcast %cst_12 : f32 to vector<16x128xf32>
    %40 = arith.cmpf oge, %38, %39 : vector<16x128xf32>
    %41 = vector.broadcast %22 : f32 to vector<16x128xf32>
    %42 = arith.mulf %41, %38 : vector<16x128xf32>
    %43 = arith.select %40, %38, %42 : vector<16x128xi1>, vector<16x128xf32>
    %c1 = arith.constant 1 : index
    %44 = memref.load %arg11[%c1] : memref<4xf32, #tpu.memory_space<smem>>
    %cst_13 = arith.constant 0.000000e+00 : f32
    %45 = vector.broadcast %cst_13 : f32 to vector<16x128xf32>
    %c1_i32_14 = arith.constant 1 : i32
    %46 = tpu.dynamic_rotate %43 by %c1_i32_14 dim 0 : vector<16x128xf32>, i32 -> vector<16x128xf32>
    %47 = vector.shape_cast %18 : vector<16x1xi1> to vector<16x1xi1>
    %48 = vector.broadcast %47 : vector<16x1xi1> to vector<16x128xi1>
    %49 = arith.select %48, %46, %45 : vector<16x128xi1>, vector<16x128xf32>
    %c15_i32_15 = arith.constant 15 : i32
    %50 = tpu.dynamic_rotate %43 by %c15_i32_15 dim 0 : vector<16x128xf32>, i32 -> vector<16x128xf32>
    %51 = vector.shape_cast %20 : vector<16x1xi1> to vector<16x1xi1>
    %52 = vector.broadcast %51 : vector<16x1xi1> to vector<16x128xi1>
    %53 = arith.select %52, %50, %45 : vector<16x128xi1>, vector<16x128xf32>
    %54 = tpu.concatenate %49, %43, %53 in 1 : vector<16x128xf32>, vector<16x128xf32>, vector<16x128xf32> -> vector<16x384xf32>
    %55 = arith.truncf %54 : vector<16x384xf32> to vector<16x384xbf16>
    %c0_16 = arith.constant 0 : index
    %c0_17 = arith.constant 0 : index
    %56 = vector.load %arg5[%c0_16, %c0_17] : memref<384x128xbf16, #tpu.memory_space<vmem>>, vector<384x128xbf16>
    %cst_18 = arith.constant dense<0.000000e+00> : vector<16x128xf32>
    %57 = tpu.matmul %55, %56, %cst_18 {dimension_numbers = #tpu.dot_dimension_numbers<[1], [0], [0], [1], [0, 0, 1, 1], [], []>} : vector<16x384xbf16>, vector<384x128xbf16>, vector<16x128xf32> -> vector<16x128xf32>
    %c0_19 = arith.constant 0 : index
    %c0_20 = arith.constant 0 : index
    %58 = vector.load %arg6[%c0_19, %c0_20] : memref<1x128xf32, #tpu.memory_space<vmem>>, vector<1x128xf32>
    %59 = vector.broadcast %58 : vector<1x128xf32> to vector<16x128xf32>
    %60 = arith.addf %57, %59 : vector<16x128xf32>
    %cst_21 = arith.constant 0.000000e+00 : f32
    %61 = vector.broadcast %cst_21 : f32 to vector<16x128xf32>
    %62 = arith.cmpf oge, %60, %61 : vector<16x128xf32>
    %63 = vector.broadcast %44 : f32 to vector<16x128xf32>
    %64 = arith.mulf %63, %60 : vector<16x128xf32>
    %65 = arith.select %62, %60, %64 : vector<16x128xi1>, vector<16x128xf32>
    %c2 = arith.constant 2 : index
    %66 = memref.load %arg11[%c2] : memref<4xf32, #tpu.memory_space<smem>>
    %cst_22 = arith.constant 0.000000e+00 : f32
    %67 = vector.broadcast %cst_22 : f32 to vector<16x128xf32>
    %c1_i32_23 = arith.constant 1 : i32
    %68 = tpu.dynamic_rotate %65 by %c1_i32_23 dim 0 : vector<16x128xf32>, i32 -> vector<16x128xf32>
    %69 = vector.shape_cast %18 : vector<16x1xi1> to vector<16x1xi1>
    %70 = vector.broadcast %69 : vector<16x1xi1> to vector<16x128xi1>
    %71 = arith.select %70, %68, %67 : vector<16x128xi1>, vector<16x128xf32>
    %c15_i32_24 = arith.constant 15 : i32
    %72 = tpu.dynamic_rotate %65 by %c15_i32_24 dim 0 : vector<16x128xf32>, i32 -> vector<16x128xf32>
    %73 = vector.shape_cast %20 : vector<16x1xi1> to vector<16x1xi1>
    %74 = vector.broadcast %73 : vector<16x1xi1> to vector<16x128xi1>
    %75 = arith.select %74, %72, %67 : vector<16x128xi1>, vector<16x128xf32>
    %76 = tpu.concatenate %71, %65, %75 in 1 : vector<16x128xf32>, vector<16x128xf32>, vector<16x128xf32> -> vector<16x384xf32>
    %77 = arith.truncf %76 : vector<16x384xf32> to vector<16x384xbf16>
    %c0_25 = arith.constant 0 : index
    %c0_26 = arith.constant 0 : index
    %78 = vector.load %arg7[%c0_25, %c0_26] : memref<384x256xbf16, #tpu.memory_space<vmem>>, vector<384x256xbf16>
    %cst_27 = arith.constant dense<0.000000e+00> : vector<16x256xf32>
    %79 = tpu.matmul %77, %78, %cst_27 {dimension_numbers = #tpu.dot_dimension_numbers<[1], [0], [0], [1], [0, 0, 1, 1], [], []>} : vector<16x384xbf16>, vector<384x256xbf16>, vector<16x256xf32> -> vector<16x256xf32>
    %c0_28 = arith.constant 0 : index
    %c0_29 = arith.constant 0 : index
    %80 = vector.load %arg8[%c0_28, %c0_29] : memref<1x256xf32, #tpu.memory_space<vmem>>, vector<1x256xf32>
    %81 = vector.broadcast %80 : vector<1x256xf32> to vector<16x256xf32>
    %82 = arith.addf %79, %81 : vector<16x256xf32>
    %cst_30 = arith.constant 0.000000e+00 : f32
    %83 = vector.broadcast %cst_30 : f32 to vector<16x256xf32>
    %84 = arith.cmpf oge, %82, %83 : vector<16x256xf32>
    %85 = vector.broadcast %66 : f32 to vector<16x256xf32>
    %86 = arith.mulf %85, %82 : vector<16x256xf32>
    %87 = arith.select %84, %82, %86 : vector<16x256xi1>, vector<16x256xf32>
    %c3 = arith.constant 3 : index
    %88 = memref.load %arg11[%c3] : memref<4xf32, #tpu.memory_space<smem>>
    %cst_31 = arith.constant 0.000000e+00 : f32
    %89 = vector.broadcast %cst_31 : f32 to vector<16x256xf32>
    %c1_i32_32 = arith.constant 1 : i32
    %90 = tpu.dynamic_rotate %87 by %c1_i32_32 dim 0 : vector<16x256xf32>, i32 -> vector<16x256xf32>
    %91 = vector.shape_cast %18 : vector<16x1xi1> to vector<16x1xi1>
    %92 = vector.broadcast %91 : vector<16x1xi1> to vector<16x256xi1>
    %93 = arith.select %92, %90, %89 : vector<16x256xi1>, vector<16x256xf32>
    %c15_i32_33 = arith.constant 15 : i32
    %94 = tpu.dynamic_rotate %87 by %c15_i32_33 dim 0 : vector<16x256xf32>, i32 -> vector<16x256xf32>
    %95 = vector.shape_cast %20 : vector<16x1xi1> to vector<16x1xi1>
    %96 = vector.broadcast %95 : vector<16x1xi1> to vector<16x256xi1>
    %97 = arith.select %96, %94, %89 : vector<16x256xi1>, vector<16x256xf32>
    %98 = tpu.concatenate %93, %87, %97 in 1 : vector<16x256xf32>, vector<16x256xf32>, vector<16x256xf32> -> vector<16x768xf32>
    %99 = arith.truncf %98 : vector<16x768xf32> to vector<16x768xbf16>
    %c0_34 = arith.constant 0 : index
    %c0_35 = arith.constant 0 : index
    %100 = vector.load %arg9[%c0_34, %c0_35] : memref<768x512xbf16, #tpu.memory_space<vmem>>, vector<768x512xbf16>
    %cst_36 = arith.constant dense<0.000000e+00> : vector<16x512xf32>
    %101 = tpu.matmul %99, %100, %cst_36 {dimension_numbers = #tpu.dot_dimension_numbers<[1], [0], [0], [1], [0, 0, 1, 1], [], []>} : vector<16x768xbf16>, vector<768x512xbf16>, vector<16x512xf32> -> vector<16x512xf32>
    %c0_37 = arith.constant 0 : index
    %c0_38 = arith.constant 0 : index
    %102 = vector.load %arg10[%c0_37, %c0_38] : memref<1x512xf32, #tpu.memory_space<vmem>>, vector<1x512xf32>
    %103 = vector.broadcast %102 : vector<1x512xf32> to vector<16x512xf32>
    %104 = arith.addf %101, %103 : vector<16x512xf32>
    %cst_39 = arith.constant 0.000000e+00 : f32
    %105 = vector.broadcast %cst_39 : f32 to vector<16x512xf32>
    %106 = arith.cmpf oge, %104, %105 : vector<16x512xf32>
    %107 = vector.broadcast %88 : f32 to vector<16x512xf32>
    %108 = arith.mulf %107, %104 : vector<16x512xf32>
    %109 = arith.select %106, %104, %108 : vector<16x512xi1>, vector<16x512xf32>
    %c0_40 = arith.constant 0 : index
    %c0_41 = arith.constant 0 : index
    %110 = vector.load %arg2[%c0_40, %c0_41] : memref<2x16xf32, #tpu.memory_space<vmem>>, vector<2x16xf32>
    %cst_42 = arith.constant dense<0.000000e+00> : vector<2x512xf32>
    %111 = tpu.matmul %110, %109, %cst_42 {dimension_numbers = #tpu.dot_dimension_numbers<[1], [0], [0], [1], [0, 0, 1, 1], [], []>} : vector<2x16xf32>, vector<16x512xf32>, vector<2x512xf32> -> vector<2x512xf32>
    %c0_43 = arith.constant 0 : index
    %c0_44 = arith.constant 0 : index
    %112 = vector.load %arg12[%c0_43, %c0_44] : memref<2x512xf32, #tpu.memory_space<vmem>>, vector<2x512xf32>
    tpu.vector_store %arg12[%c0_43, %c0_44], %111 {strides = array<i32>} : memref<2x512xf32, #tpu.memory_space<vmem>>, vector<2x512xf32>,
    return
  }
  func.func @transform_0(%arg0: i32) -> (i32, i32) {
    %c0_i32 = arith.constant 0 : i32
    %c0_i32_0 = arith.constant 0 : i32
    return %arg0, %c0_i32 : i32, i32
  }
  func.func @transform_1(%arg0: i32) -> (i32, i32) {
    %c0_i32 = arith.constant 0 : i32
    %c0_i32_0 = arith.constant 0 : i32
    %c0_i32_1 = arith.constant 0 : i32
    return %c0_i32, %c0_i32_0 : i32, i32
  }
  func.func @transform_2(%arg0: i32) -> (i32, i32) {
    %c0_i32 = arith.constant 0 : i32
    %c0_i32_0 = arith.constant 0 : i32
    %c0_i32_1 = arith.constant 0 : i32
    return %c0_i32, %c0_i32_0 : i32, i32
  }
  func.func @transform_3(%arg0: i32) -> (i32, i32) {
    %c0_i32 = arith.constant 0 : i32
    %c0_i32_0 = arith.constant 0 : i32
    %c0_i32_1 = arith.constant 0 : i32
    return %c0_i32, %c0_i32_0 : i32, i32
  }
  func.func @transform_4(%arg0: i32) -> (i32, i32) {
    %c0_i32 = arith.constant 0 : i32
    %c0_i32_0 = arith.constant 0 : i32
    %c0_i32_1 = arith.constant 0 : i32
    return %c0_i32, %c0_i32_0 : i32, i32
  }
  func.func @transform_5(%arg0: i32) -> (i32, i32) {
    %c0_i32 = arith.constant 0 : i32
    %c0_i32_0 = arith.constant 0 : i32
    %c0_i32_1 = arith.constant 0 : i32
    return %c0_i32, %c0_i32_0 : i32, i32
  }
  func.func @transform_6(%arg0: i32) -> (i32, i32) {
    %c0_i32 = arith.constant 0 : i32
    %c0_i32_0 = arith.constant 0 : i32
    %c0_i32_1 = arith.constant 0 : i32
    return %c0_i32, %c0_i32_0 : i32, i32
  }
  func.func @transform_7(%arg0: i32) -> (i32, i32) {
    %c0_i32 = arith.constant 0 : i32
    %c0_i32_0 = arith.constant 0 : i32
    %c0_i32_1 = arith.constant 0 : i32
    return %c0_i32, %c0_i32_0 : i32, i32
  }
  func.func @transform_8(%arg0: i32) -> (i32, i32) {
    %c0_i32 = arith.constant 0 : i32
    %c0_i32_0 = arith.constant 0 : i32
    %c0_i32_1 = arith.constant 0 : i32
    return %c0_i32, %c0_i32_0 : i32, i32
  }
  func.func @transform_9(%arg0: i32) -> (i32, i32) {
    %c0_i32 = arith.constant 0 : i32
    %c0_i32_0 = arith.constant 0 : i32
    %c0_i32_1 = arith.constant 0 : i32
    return %c0_i32, %c0_i32_0 : i32, i32
  }
  func.func @transform_10(%arg0: i32) -> i32 {
    %c0_i32 = arith.constant 0 : i32
    %c0_i32_0 = arith.constant 0 : i32
    return %c0_i32 : i32
  }
  func.func @transform_11(%arg0: i32) -> (i32, i32) {
    %c0_i32 = arith.constant 0 : i32
    %c0_i32_0 = arith.constant 0 : i32
    return %arg0, %c0_i32 : i32, i32
  }
}

</mosaic_0001>

<llo_original>
// kernel: tpu_custom_call.1
$region0: #{tpu_custom_call.1}
  #allocation0 [shape = 'u32[]', space=smem, size = 0x4, offset = 0x4, fixed_abs, tag = 'smem constant byte address 0x4 - core index']
  #allocation1 [shape = 'u32[144,128]{1,0:T(1,128)}', space=vmem, size = 0x12000, scoped, tag = 'internal scratch']
  %s0 = inlined_call_operand.hbm [shape: f32[16,128], index: 0, kind: input, shape index: {}]
  %s1 = inlined_call_operand.hbm [shape: f32[2,16], index: 1, kind: input, shape index: {}]
  %s2 = inlined_call_operand.hbm [shape: bf16[384,128], index: 2, kind: input, shape index: {}]
  %s3 = inlined_call_operand.vmem [shape: f32[1,128], index: 3, kind: input, shape index: {}]
  %s4 = inlined_call_operand.hbm [shape: bf16[384,128], index: 4, kind: input, shape index: {}]
  %s5 = inlined_call_operand.vmem [shape: f32[1,128], index: 5, kind: input, shape index: {}]
  %s6 = inlined_call_operand.hbm [shape: bf16[384,256], index: 6, kind: input, shape index: {}]
  %s7 = inlined_call_operand.vmem [shape: f32[1,256], index: 7, kind: input, shape index: {}]
  %s8 = inlined_call_operand.hbm [shape: bf16[768,512], index: 8, kind: input, shape index: {}]
  %s9 = inlined_call_operand.vmem [shape: f32[1,512], index: 9, kind: input, shape index: {}]
  %s10 = inlined_call_operand.vmem [shape: f32[4], index: 10, kind: input, shape index: {}]
  %s11 = inlined_call_operand.hbm [shape: f32[2,512], index: 11, kind: output, shape index: {}]
  %s12 = sld [smem:[#allocation0]]
  $region82: #{tpu_custom_call.1} parent=0
    _
  %s14 = ssub.s32 1, %s12
  %s15 = scalar_select 0, %s14, %s12
  $region1: #{tpu_custom_call.1} parent=0
    #allocation2 [shape = 'u8[8192]{0}', space=vmem, size = 0x2000, scoped, tag = 'input window, operand 0, single buffered']
    #allocation3 [shape = 's32[1]{0}', space=sflag, size = 0x4, scoped, tag = 'scoped memory for tpu_custom_call.1']
    #allocation4 [shape = 's32[1]{0}', space=sflag, size = 0x4, scoped, tag = 'scoped memory for tpu_custom_call.1']
    #allocation5 [shape = 's32[1]{0}', space=sflag, size = 0x4, scoped, tag = 'scoped memory for tpu_custom_call.1']
    #allocation6 [shape = 'u8[1024]{0}', space=vmem, size = 0x400, scoped, tag = 'input window, operand 1, single buffered']
    #allocation7 [shape = 's32[1]{0}', space=sflag, size = 0x4, scoped, tag = 'scoped memory for tpu_custom_call.1']
    #allocation8 [shape = 'u8[98304]{0}', space=vmem, size = 0x18000, scoped, tag = 'input window, operand 2, single buffered']
    #allocation9 [shape = 'u8[98304]{0}', space=vmem, size = 0x18000, scoped, tag = 'input window, operand 4, single buffered']
    #allocation10 [shape = 's32[1]{0}', space=sflag, size = 0x4, scoped, tag = 'scoped memory for tpu_custom_call.1']
    #allocation11 [shape = 'u8[196608]{0}', space=vmem, size = 0x30000, scoped, tag = 'input window, operand 6, single buffered']
    #allocation12 [shape = 'u8[786432]{0}', space=vmem, size = 0xc0000, scoped, tag = 'input window, operand 8, single buffered']
    #allocation13 [shape = 's32[1]{0}', space=sflag, size = 0x4, scoped, tag = 'scoped memory for tpu_custom_call.1']
    #allocation14 [shape = 'u8[512]{0}', space=smem, size = 0x200, scoped, tag = 'input window, operand 10, single buffered']
    #allocation15 [shape = 'u8[4096]{0}', space=vmem, size = 0x1000, scoped, tag = 'output window, operand 0, single buffered']
    %16 = vsyncpa [#allocation3], 0
    %17 = vsyncpa [#allocation7], 0
    %18 = vsyncpa [#allocation10], 0
    %19 = vsyncpa [#allocation13], 0
    %20 = vsyncpa [#allocation5], 0
    %21 = vsyncpa [#allocation4], 0
    // Predicated region
    $region2: #{tpu_custom_call.1} parent=1 // pred_check
      _
    $region3: #{tpu_custom_call.1} parent=1 // pred_check_branch
      %23 = sbr.rel (0) target = $region5
    $region4: #{tpu_custom_call.1} parent=1 // pred_region
      %s25 = ssub.s32 256, 256
      %26 = vsyncadd [#allocation3], %s25
      %s27 = sshll.u32 [#allocation2], 4
      %s28 = int_to_ptr.vmem [resolvable:$true] %s27
      %33 = dma.hbm_to_vmem [thread:$0]  %s0, 256, %s28, [#allocation3], 128, 128, 8
    $region5: #{tpu_custom_call.1} parent=1 // pred_fallthru
      _
    // Predicated region
    $region6: #{tpu_custom_call.1} parent=1 // pred_check
      _
    $region7: #{tpu_custom_call.1} parent=1 // pred_check_branch
      %35 = sbr.rel (0) target = $region9
    $region8: #{tpu_custom_call.1} parent=1 // pred_region
      %s37 = ssub.s32 32, 32
      %38 = vsyncadd [#allocation7], %s37
      %s40 = sshll.u32 [#allocation6], 4
      %s41 = int_to_ptr.vmem [resolvable:$true] %s40
      %43 = dma.hbm_to_vmem [thread:$0]  %s1, 32, %s41, [#allocation7]
    $region9: #{tpu_custom_call.1} parent=1 // pred_fallthru
      _
    // Predicated region
    $region10: #{tpu_custom_call.1} parent=1 // pred_check
      _
    $region11: #{tpu_custom_call.1} parent=1 // pred_check_branch
      %45 = sbr.rel (0) target = $region13
    $region12: #{tpu_custom_call.1} parent=1 // pred_region
      %s47 = ssub.s32 3072, 3072
      %48 = vsyncadd [#allocation7], %s47
      %s49 = sshll.u32 [#allocation8], 4
      %s50 = int_to_ptr.vmem [resolvable:$true] %s49
      %55 = dma.hbm_to_vmem [thread:$0]  %s2, 3072, %s50, [#allocation7], 64, 64, 4
    $region13: #{tpu_custom_call.1} parent=1 // pred_fallthru
      _
    // Predicated region
    $region14: #{tpu_custom_call.1} parent=1 // pred_check
      _
    $region15: #{tpu_custom_call.1} parent=1 // pred_check_branch
      %57 = sbr.rel (0) target = $region17
    $region16: #{tpu_custom_call.1} parent=1 // pred_region
      _
    $region17: #{tpu_custom_call.1} parent=1 // pred_fallthru
      _
    // Predicated region
    $region18: #{tpu_custom_call.1} parent=1 // pred_check
      _
    $region19: #{tpu_custom_call.1} parent=1 // pred_check_branch
      %59 = sbr.rel (0) target = $region21
    $region20: #{tpu_custom_call.1} parent=1 // pred_region
      %s61 = ssub.s32 3072, 3072
      %62 = vsyncadd [#allocation10], %s61
      %s63 = sshll.u32 [#allocation9], 4
      %s64 = int_to_ptr.vmem [resolvable:$true] %s63
      %69 = dma.hbm_to_vmem [thread:$0]  %s4, 3072, %s64, [#allocation10], 64, 64, 4
    $region21: #{tpu_custom_call.1} parent=1 // pred_fallthru
      _
    // Predicated region
    $region22: #{tpu_custom_call.1} parent=1 // pred_check
      _
    $region23: #{tpu_custom_call.1} parent=1 // pred_check_branch
      %71 = sbr.rel (0) target = $region25
    $region24: #{tpu_custom_call.1} parent=1 // pred_region
      _
    $region25: #{tpu_custom_call.1} parent=1 // pred_fallthru
      _
    // Predicated region
    $region26: #{tpu_custom_call.1} parent=1 // pred_check
      _
    $region27: #{tpu_custom_call.1} parent=1 // pred_check_branch
      %73 = sbr.rel (0) target = $region29
    $region28: #{tpu_custom_call.1} parent=1 // pred_region
      %s75 = ssub.s32 6144, 6144
      %76 = vsyncadd [#allocation10], %s75
      %s77 = sshll.u32 [#allocation11], 4
      %s78 = int_to_ptr.vmem [resolvable:$true] %s77
      %83 = dma.hbm_to_vmem [thread:$0]  %s6, 6144, %s78, [#allocation10], 128, 128, 8
    $region29: #{tpu_custom_call.1} parent=1 // pred_fallthru
      _
    // Predicated region
    $region30: #{tpu_custom_call.1} parent=1 // pred_check
      _
    $region31: #{tpu_custom_call.1} parent=1 // pred_check_branch
      %85 = sbr.rel (0) target = $region33
    $region32: #{tpu_custom_call.1} parent=1 // pred_region
      _
    $region33: #{tpu_custom_call.1} parent=1 // pred_fallthru
      _
    // Predicated region
    $region34: #{tpu_custom_call.1} parent=1 // pred_check
      _
    $region35: #{tpu_custom_call.1} parent=1 // pred_check_branch
      %87 = sbr.rel (0) target = $region37
    $region36: #{tpu_custom_call.1} parent=1 // pred_region
      %s89 = ssub.s32 24576, 24576
      %90 = vsyncadd [#allocation13], %s89
      %s91 = sshll.u32 [#allocation12], 4
      %s92 = int_to_ptr.vmem [resolvable:$true] %s91
      %97 = dma.hbm_to_vmem [thread:$0]  %s8, 24576, %s92, [#allocation13], 256, 256, 16
    $region37: #{tpu_custom_call.1} parent=1 // pred_fallthru
      _
    // Predicated region
    $region38: #{tpu_custom_call.1} parent=1 // pred_check
      _
    $region39: #{tpu_custom_call.1} parent=1 // pred_check_branch
      %99 = sbr.rel (0) target = $region41
    $region40: #{tpu_custom_call.1} parent=1 // pred_region
      _
    $region41: #{tpu_custom_call.1} parent=1 // pred_fallthru
      _
    // Predicated region
    $region42: #{tpu_custom_call.1} parent=1 // pred_check
      _
    $region43: #{tpu_custom_call.1} parent=1 // pred_check_branch
      %101 = sbr.rel (0) target = $region45
    $region44: #{tpu_custom_call.1} parent=1 // pred_region
      %s103 = ssub.s32 16, 16
      %104 = vsyncadd [#allocation5], %s103
      %s106 = sshll.u32 %s10, 4
      %s107 = int_to_ptr.vmem [resolvable:$true] %s106
      %109 = dma.vmem_to_smem %s107, 16, [#allocation14], [#allocation5]
    $region45: #{tpu_custom_call.1} parent=1 // pred_fallthru
      _
    // Predicated region
    $region46: #{tpu_custom_call.1} parent=1 // pred_check
      _
    $region47: #{tpu_custom_call.1} parent=1 // pred_check_branch
      %111 = sbr.rel (0) target = $region49
    $region48: #{tpu_custom_call.1} parent=1 // pred_region
      %112 = dma.done [#allocation3], 256
    $region49: #{tpu_custom_call.1} parent=1 // pred_fallthru
      _
    // Predicated region
    $region50: #{tpu_custom_call.1} parent=1 // pred_check
      _
    $region51: #{tpu_custom_call.1} parent=1 // pred_check_branch
      %114 = sbr.rel (0) target = $region53
    $region52: #{tpu_custom_call.1} parent=1 // pred_region
      %115 = dma.done [#allocation7], 32
    $region53: #{tpu_custom_call.1} parent=1 // pred_fallthru
      _
    // Predicated region
    $region54: #{tpu_custom_call.1} parent=1 // pred_check
      _
    $region55: #{tpu_custom_call.1} parent=1 // pred_check_branch
      %117 = sbr.rel (0) target = $region57
    $region56: #{tpu_custom_call.1} parent=1 // pred_region
      %118 = dma.done [#allocation7], 3072
    $region57: #{tpu_custom_call.1} parent=1 // pred_fallthru
      _
    // Predicated region
    $region58: #{tpu_custom_call.1} parent=1 // pred_check
      _
    $region59: #{tpu_custom_call.1} parent=1 // pred_check_branch
      %120 = sbr.rel (0) target = $region61
    $region60: #{tpu_custom_call.1} parent=1 // pred_region
      %121 = dma.done [#allocation10], 3072
    $region61: #{tpu_custom_call.1} parent=1 // pred_fallthru
      _
    // Predicated region
    $region62: #{tpu_custom_call.1} parent=1 // pred_check
      _
    $region63: #{tpu_custom_call.1} parent=1 // pred_check_branch
      %123 = sbr.rel (0) target = $region65
    $region64: #{tpu_custom_call.1} parent=1 // pred_region
      %124 = dma.done [#allocation10], 6144
    $region65: #{tpu_custom_call.1} parent=1 // pred_fallthru
      _
    // Predicated region
    $region66: #{tpu_custom_call.1} parent=1 // pred_check
      _
    $region67: #{tpu_custom_call.1} parent=1 // pred_check_branch
      %126 = sbr.rel (0) target = $region69
    $region68: #{tpu_custom_call.1} parent=1 // pred_region
      %127 = dma.done [#allocation13], 24576
    $region69: #{tpu_custom_call.1} parent=1 // pred_fallthru
      _
    // Predicated region
    $region70: #{tpu_custom_call.1} parent=1 // pred_check
      _
    $region71: #{tpu_custom_call.1} parent=1 // pred_check_branch
      %129 = sbr.rel (0) target = $region73
    $region72: #{tpu_custom_call.1} parent=1 // pred_region
      %130 = dma.done [#allocation5], 16
    $region73: #{tpu_custom_call.1} parent=1 // pred_fallthru
      _
    %131 = sfence
    %v133 = vlaneseq
    %v134 = vshrl.u32 %v133, 7
    %v135 = vadd.s32 %v134, 8
    %vm136 = vcmp.lt.s32.totalorder %v134, 0
    %v137 = vsub.s32 0, %v134
    %v138 = vsel %vm136, %v137, %v134
    %v139 = vshrl.u32 %v138, 3
    %v140 = vand.u32 %v138, 7
    %v141 = vsub.s32 0, %v140
    %v142 = vsel %vm136, %v141, %v140
    %vm143 = vcmp.lt.s32.totalorder %v135, 0
    %v144 = vsub.s32 0, %v135
    %v145 = vsel %vm143, %v144, %v135
    %v146 = vshrl.u32 %v145, 3
    %v147 = vand.u32 %v145, 7
    %v148 = vsub.s32 0, %v147
    %v149 = vsel %vm143, %v148, %v147
    %vm150 = vcmp.ne.s32.totalorder %v142, 0
    %vm151 = vcmp.ne.s32.totalorder %v149, 0
    %vm152 = vcmp.lt.s32.totalorder %v142, 0
    %vm153 = vcmp.lt.s32.totalorder %v149, 0
    %vm154 = vmand %vm152, %vm150
    %vm155 = vmand %vm153, %vm151
    %v156 = vadd.s32 %v142, 8
    %v157 = vadd.s32 %v149, 8
    %v158 = vsel %vm154, %v156, %v142
    %v159 = vsel %vm155, %v157, %v149
    %vm160 = vcmp.ne.s32.totalorder %v158, 0
    %vm161 = vcmp.ne.s32.totalorder %v159, 0
    %vm162 = vcmp.ne.s32.totalorder %v158, 7
    %vm163 = vcmp.ne.s32.totalorder %v159, 7
    %v164 = vld [vmem:[#allocation2] sm:$0xff]
    %v165 = vld [vmem:[#allocation2 + $0x8] sm:$0xff]
    %s166 = sld [smem:[#allocation14]]
    %v167 = vrot.slane %v164, 7
    %v168 = vrot.slane %v165, 7
    %vm169 = vcmp.lt.s32.totalorder %v134, 1
    %v170 = vsel %vm169, %v167, %v168
    %v171 = vsel %vm169, %v168, %v167
    %v172 = vsel %vm160, 1, 0
    %v173 = vsel %vm161, 1, 0
    %vm174 = vcmp.eq.s32.totalorder %v172, 1
    %vm175 = vcmp.eq.s32.totalorder %v173, 1
    %v176 = vsel %vm174, %v171, 0.0
    %v177 = vsel %vm175, %v170, 0.0
    %v178 = vrot.slane %v164, 1
    %v179 = vrot.slane %v165, 1
    %vm180 = vcmp.lt.s32.totalorder %v134, 7
    %v181 = vsel %vm180, %v178, %v179
    %v182 = vsel %vm180, %v179, %v178
    %v183 = vsel %vm162, 1, 0
    %v184 = vsel %vm163, 1, 0
    %vm185 = vcmp.eq.s32.totalorder %v183, 1
    %vm186 = vcmp.eq.s32.totalorder %v184, 1
    %v187 = vsel %vm185, %v181, 0.0
    %v188 = vsel %vm186, %v182, 0.0
    %v189 = vpack.c.bf16 %v177, %v176
    %v190 = vpack.c.bf16 %v165, %v164
    %v191 = vpack.c.bf16 %v188, %v187
    %v192 = vld [vmem:[#allocation8] sm:$0xf]
    %v193 = vld [vmem:[#allocation8 + $0x4] sm:$0xf]
    %v194 = vld [vmem:[#allocation8 + $0x8] sm:$0xf]
    %v195 = vld [vmem:[#allocation8 + $0xc] sm:$0xf]
    %v196 = vld [vmem:[#allocation8 + $0x10] sm:$0xf]
    %v197 = vld [vmem:[#allocation8 + $0x14] sm:$0xf]
    %v198 = vld [vmem:[#allocation8 + $0x18] sm:$0xf]
    %v199 = vld [vmem:[#allocation8 + $0x1c] sm:$0xf]
    %v200 = vld [vmem:[#allocation8 + $0x20] sm:$0xf]
    %v201 = vld [vmem:[#allocation8 + $0x24] sm:$0xf]
    %v202 = vld [vmem:[#allocation8 + $0x28] sm:$0xf]
    %v203 = vld [vmem:[#allocation8 + $0x2c] sm:$0xf]
    %v204 = vld [vmem:[#allocation8 + $0x30] sm:$0xf]
    %v205 = vld [vmem:[#allocation8 + $0x34] sm:$0xf]
    %v206 = vld [vmem:[#allocation8 + $0x38] sm:$0xf]
    %v207 = vld [vmem:[#allocation8 + $0x3c] sm:$0xf]
    %v208 = vld [vmem:[#allocation8 + $0x40] sm:$0xf]
    %v209 = vld [vmem:[#allocation8 + $0x44] sm:$0xf]
    %v210 = vld [vmem:[#allocation8 + $0x48] sm:$0xf]
    %v211 = vld [vmem:[#allocation8 + $0x4c] sm:$0xf]
    %v212 = vld [vmem:[#allocation8 + $0x50] sm:$0xf]
    %v213 = vld [vmem:[#allocation8 + $0x54] sm:$0xf]
    %v214 = vld [vmem:[#allocation8 + $0x58] sm:$0xf]
    %v215 = vld [vmem:[#allocation8 + $0x5c] sm:$0xf]
    %v216 = vld [vmem:[#allocation8 + $0x60] sm:$0xf]
    %v217 = vld [vmem:[#allocation8 + $0x64] sm:$0xf]
    %v218 = vld [vmem:[#allocation8 + $0x68] sm:$0xf]
    %v219 = vld [vmem:[#allocation8 + $0x6c] sm:$0xf]
    %v220 = vld [vmem:[#allocation8 + $0x70] sm:$0xf]
    %v221 = vld [vmem:[#allocation8 + $0x74] sm:$0xf]
    %v222 = vld [vmem:[#allocation8 + $0x78] sm:$0xf]
    %v223 = vld [vmem:[#allocation8 + $0x7c] sm:$0xf]
    %v224 = vld [vmem:[#allocation8 + $0x80] sm:$0xf]
    %v225 = vld [vmem:[#allocation8 + $0x84] sm:$0xf]
    %v226 = vld [vmem:[#allocation8 + $0x88] sm:$0xf]
    %v227 = vld [vmem:[#allocation8 + $0x8c] sm:$0xf]
    %v228 = vld [vmem:[#allocation8 + $0x90] sm:$0xf]
    %v229 = vld [vmem:[#allocation8 + $0x94] sm:$0xf]
    %v230 = vld [vmem:[#allocation8 + $0x98] sm:$0xf]
    %v231 = vld [vmem:[#allocation8 + $0x9c] sm:$0xf]
    %v232 = vld [vmem:[#allocation8 + $0xa0] sm:$0xf]
    %v233 = vld [vmem:[#allocation8 + $0xa4] sm:$0xf]
    %v234 = vld [vmem:[#allocation8 + $0xa8] sm:$0xf]
    %v235 = vld [vmem:[#allocation8 + $0xac] sm:$0xf]
    %v236 = vld [vmem:[#allocation8 + $0xb0] sm:$0xf]
    %v237 = vld [vmem:[#allocation8 + $0xb4] sm:$0xf]
    %v238 = vld [vmem:[#allocation8 + $0xb8] sm:$0xf]
    %v239 = vld [vmem:[#allocation8 + $0xbc] sm:$0xf]
    %v240 = vld [vmem:[%s3] sm:$0x1]
    %v242 = vlaneseq
    %v243 = vshrl.u32 %v242, 7
    %v244 = vsub.s32 0, %v243
    %v245 = vrot.slane %v240, %v244
    %v295 = vunpack.c.l.b16 %v192
    %v296 = vunpack.c.l.b16 %v193
    %v297 = vunpack.c.l.b16 %v194
    %v298 = vunpack.c.l.b16 %v195
    %v299 = vunpack.c.l.b16 %v196
    %v300 = vunpack.c.l.b16 %v197
    %v301 = vunpack.c.l.b16 %v198
    %v302 = vunpack.c.l.b16 %v199
    %v303 = vunpack.c.l.b16 %v200
    %v304 = vunpack.c.l.b16 %v201
    %v305 = vunpack.c.l.b16 %v202
    %v306 = vunpack.c.l.b16 %v203
    %v307 = vunpack.c.l.b16 %v204
    %v308 = vunpack.c.l.b16 %v205
    %v309 = vunpack.c.l.b16 %v206
    %v310 = vunpack.c.l.b16 %v207
    %v311 = vunpack.c.l.b16 %v208
    %v312 = vunpack.c.l.b16 %v209
    %v313 = vunpack.c.l.b16 %v210
    %v314 = vunpack.c.l.b16 %v211
    %v315 = vunpack.c.l.b16 %v212
    %v316 = vunpack.c.l.b16 %v213
    %v317 = vunpack.c.l.b16 %v214
    %v318 = vunpack.c.l.b16 %v215
    %v319 = vunpack.c.l.b16 %v216
    %v320 = vunpack.c.l.b16 %v217
    %v321 = vunpack.c.l.b16 %v218
    %v322 = vunpack.c.l.b16 %v219
    %v323 = vunpack.c.l.b16 %v220
    %v324 = vunpack.c.l.b16 %v221
    %v325 = vunpack.c.l.b16 %v222
    %v326 = vunpack.c.l.b16 %v223
    %v327 = vunpack.c.l.b16 %v224
    %v328 = vunpack.c.l.b16 %v225
    %v329 = vunpack.c.l.b16 %v226
    %v330 = vunpack.c.l.b16 %v227
    %v331 = vunpack.c.l.b16 %v228
    %v332 = vunpack.c.l.b16 %v229
    %v333 = vunpack.c.l.b16 %v230
    %v334 = vunpack.c.l.b16 %v231
    %v335 = vunpack.c.l.b16 %v232
    %v336 = vunpack.c.l.b16 %v233
    %v337 = vunpack.c.l.b16 %v234
    %v338 = vunpack.c.l.b16 %v235
    %v339 = vunpack.c.l.b16 %v236
    %v340 = vunpack.c.l.b16 %v237
    %v341 = vunpack.c.l.b16 %v238
    %v342 = vunpack.c.l.b16 %v239
    %v343 = vpack.c.b16 %v296, %v295
    %v344 = vpack.c.b16 %v298, %v297
    %v345 = vpack.c.b16 %v300, %v299
    %v346 = vpack.c.b16 %v302, %v301
    %v347 = vpack.c.b16 %v304, %v303
    %v348 = vpack.c.b16 %v306, %v305
    %v349 = vpack.c.b16 %v308, %v307
    %v350 = vpack.c.b16 %v310, %v309
    %v351 = vpack.c.b16 %v312, %v311
    %v352 = vpack.c.b16 %v314, %v313
    %v353 = vpack.c.b16 %v316, %v315
    %v354 = vpack.c.b16 %v318, %v317
    %v355 = vpack.c.b16 %v320, %v319
    %v356 = vpack.c.b16 %v322, %v321
    %v357 = vpack.c.b16 %v324, %v323
    %v358 = vpack.c.b16 %v326, %v325
    %v359 = vpack.c.b16 %v328, %v327
    %v360 = vpack.c.b16 %v330, %v329
    %v361 = vpack.c.b16 %v332, %v331
    %v362 = vpack.c.b16 %v334, %v333
    %v363 = vpack.c.b16 %v336, %v335
    %v364 = vpack.c.b16 %v338, %v337
    %v365 = vpack.c.b16 %v340, %v339
    %v366 = vpack.c.b16 %v342, %v341
    %391 = vmatprep.subr.bf16.mxu0 0
    %392 = vmatpush1.bf16.msra.mxu0 %v350
    %393 = vmatprep.subr.bf16.mxu0 0
    %394 = vmatpush1.bf16.msra.mxu0 %v349
    %395 = vmatprep.subr.bf16.mxu0 0
    %396 = vmatpush1.bf16.msra.mxu0 %v348
    %397 = vmatprep.subr.bf16.mxu0 0
    %398 = vmatpush1.bf16.msra.mxu0 %v347
    %399 = vmatprep.subr.bf16.mxu0 0
    %400 = vmatpush1.bf16.msra.mxu0 %v346
    %401 = vmatprep.subr.bf16.mxu0 0
    %402 = vmatpush1.bf16.msra.mxu0 %v345
    %403 = vmatprep.subr.bf16.mxu0 0
    %404 = vmatpush1.bf16.msra.mxu0 %v344
    %405 = vmatprep.subr.bf16.mxu0 0
    %406 = vmatpush1.bf16.msra.mxu0 %v343
    %407 = vmatprep.subr.bf16.mxu0 0
    %408 = vmatpush2.bf16.msra.mxu0 %v358
    %409 = vmatprep.subr.bf16.mxu0 0
    %410 = vmatpush2.bf16.msra.mxu0 %v357
    %411 = vmatprep.subr.bf16.mxu0 0
    %412 = vmatpush2.bf16.msra.mxu0 %v356
    %413 = vmatprep.subr.bf16.mxu0 0
    %414 = vmatpush2.bf16.msra.mxu0 %v355
    %415 = vmatprep.subr.bf16.mxu0 0
    %416 = vmatpush2.bf16.msra.mxu0 %v354
    %417 = vmatprep.subr.bf16.mxu0 0
    %418 = vmatpush2.bf16.msra.mxu0 %v353
    %419 = vmatprep.subr.bf16.mxu0 0
    %420 = vmatpush2.bf16.msra.mxu0 %v352
    %421 = vmatprep.subr.bf16.mxu0 0
    %422 = vmatpush2.bf16.msra.mxu0 %v351
    %423 = vmatprep.mubr.bf16.mxu0 %v190
    %424 = vmatmul.mubr.bf16.gmra.mxu0 %v189
    %v425 = vpop.f32.mrf.mxu0
    %v426 = vadd.f32 %v245, %v425
    %v427 = vpop.f32.mrf.mxu0
    %v428 = vpop.f32.mrf.mxu0
    %v429 = vadd.f32 %v245, %v428
    %v430 = vpop.f32.mrf.mxu0
    %431 = vdwg.mxu0
    %432 = vmatprep.subr.bf16.mxu0 0
    %433 = vmatpush1.bf16.msra.mxu0 %v366
    %434 = vmatprep.subr.bf16.mxu0 0
    %435 = vmatpush1.bf16.msra.mxu0 %v365
    %436 = vmatprep.subr.bf16.mxu0 0
    %437 = vmatpush1.bf16.msra.mxu0 %v364
    %438 = vmatprep.subr.bf16.mxu0 0
    %439 = vmatpush1.bf16.msra.mxu0 %v363
    %440 = vmatprep.subr.bf16.mxu0 0
    %441 = vmatpush1.bf16.msra.mxu0 %v362
    %442 = vmatprep.subr.bf16.mxu0 0
    %443 = vmatpush1.bf16.msra.mxu0 %v361
    %444 = vmatprep.subr.bf16.mxu0 0
    %445 = vmatpush1.bf16.msra.mxu0 %v360
    %446 = vmatprep.subr.bf16.mxu0 0
    %447 = vmatpush1.bf16.msra.mxu0 %v359
    %448 = vmatprep.subr.bf16.mxu0 0
    %449 = vmatpush2.bf16.msra.mxu0 0
    %450 = vmatprep.subr.bf16.mxu0 0
    %451 = vmatpush2.bf16.msra.mxu0 0
    %452 = vmatprep.subr.bf16.mxu0 0
    %453 = vmatpush2.bf16.msra.mxu0 0
    %454 = vmatprep.subr.bf16.mxu0 0
    %455 = vmatpush2.bf16.msra.mxu0 0
    %456 = vmatprep.subr.bf16.mxu0 0
    %457 = vmatpush2.bf16.msra.mxu0 0
    %458 = vmatprep.subr.bf16.mxu0 0
    %459 = vmatpush2.bf16.msra.mxu0 0
    %460 = vmatprep.subr.bf16.mxu0 0
    %461 = vmatpush2.bf16.msra.mxu0 0
    %462 = vmatprep.subr.bf16.mxu0 0
    %463 = vmatpush2.bf16.msra.mxu0 0
    %464 = vmatprep.mubr.bf16.mxu0 0
    %465 = vmatmul.mubr.bf16.gmra.mxu0 %v191
    %v466 = vpop.f32.mrf.mxu0
    %v467 = vadd.f32 %v426, %v466
    %v468 = vpop.f32.mrf.mxu0
    %v469 = vpop.f32.mrf.mxu0
    %v470 = vadd.f32 %v429, %v469
    %v471 = vpop.f32.mrf.mxu0
    %472 = vdwg.mxu0
    %vm473 = vcmp.ge.f32.partialorder %v467, 0.0
    %vm474 = vcmp.ge.f32.partialorder %v470, 0.0
    %v475 = vstv %s166
    %v476 = vmul.f32 %v475, %v467
    %v477 = vmul.f32 %v475, %v470
    %v478 = vsel %vm473, %v467, %v476
    %v479 = vsel %vm474, %v470, %v477
    %s480 = sld [smem:[#allocation14 + $0x1]]
    %v481 = vrot.slane %v478, 7
    %v482 = vrot.slane %v479, 7
    %v483 = vsel %vm169, %v481, %v482
    %v484 = vsel %vm169, %v482, %v481
    %v485 = vsel %vm174, %v484, 0.0
    %v486 = vsel %vm175, %v483, 0.0
    %v487 = vrot.slane %v478, 1
    %v488 = vrot.slane %v479, 1
    %v489 = vsel %vm180, %v487, %v488
    %v490 = vsel %vm180, %v488, %v487
    %v491 = vsel %vm185, %v489, 0.0
    %v492 = vsel %vm186, %v490, 0.0
    %v493 = vpack.c.bf16 %v486, %v485
    %v494 = vpack.c.bf16 %v479, %v478
    %v495 = vpack.c.bf16 %v492, %v491
    %v496 = vld [vmem:[#allocation9] sm:$0xf]
    %v497 = vld [vmem:[#allocation9 + $0x4] sm:$0xf]
    %v498 = vld [vmem:[#allocation9 + $0x8] sm:$0xf]
    %v499 = vld [vmem:[#allocation9 + $0xc] sm:$0xf]
    %v500 = vld [vmem:[#allocation9 + $0x10] sm:$0xf]
    %v501 = vld [vmem:[#allocation9 + $0x14] sm:$0xf]
    %v502 = vld [vmem:[#allocation9 + $0x18] sm:$0xf]
    %v503 = vld [vmem:[#allocation9 + $0x1c] sm:$0xf]
    %v504 = vld [vmem:[#allocation9 + $0x20] sm:$0xf]
    %v505 = vld [vmem:[#allocation9 + $0x24] sm:$0xf]
    %v506 = vld [vmem:[#allocation9 + $0x28] sm:$0xf]
    %v507 = vld [vmem:[#allocation9 + $0x2c] sm:$0xf]
    %v508 = vld [vmem:[#allocation9 + $0x30] sm:$0xf]
    %v509 = vld [vmem:[#allocation9 + $0x34] sm:$0xf]
    %v510 = vld [vmem:[#allocation9 + $0x38] sm:$0xf]
    %v511 = vld [vmem:[#allocation9 + $0x3c] sm:$0xf]
    %v512 = vld [vmem:[#allocation9 + $0x40] sm:$0xf]
    %v513 = vld [vmem:[#allocation9 + $0x44] sm:$0xf]
    %v514 = vld [vmem:[#allocation9 + $0x48] sm:$0xf]
    %v515 = vld [vmem:[#allocation9 + $0x4c] sm:$0xf]
    %v516 = vld [vmem:[#allocation9 + $0x50] sm:$0xf]
    %v517 = vld [vmem:[#allocation9 + $0x54] sm:$0xf]
    %v518 = vld [vmem:[#allocation9 + $0x58] sm:$0xf]
    %v519 = vld [vmem:[#allocation9 + $0x5c] sm:$0xf]
    %v520 = vld [vmem:[#allocation9 + $0x60] sm:$0xf]
    %v521 = vld [vmem:[#allocation9 + $0x64] sm:$0xf]
    %v522 = vld [vmem:[#allocation9 + $0x68] sm:$0xf]
    %v523 = vld [vmem:[#allocation9 + $0x6c] sm:$0xf]
    %v524 = vld [vmem:[#allocation9 + $0x70] sm:$0xf]
    %v525 = vld [vmem:[#allocation9 + $0x74] sm:$0xf]
    %v526 = vld [vmem:[#allocation9 + $0x78] sm:$0xf]
    %v527 = vld [vmem:[#allocation9 + $0x7c] sm:$0xf]
    %v528 = vld [vmem:[#allocation9 + $0x80] sm:$0xf]
    %v529 = vld [vmem:[#allocation9 + $0x84] sm:$0xf]
    %v530 = vld [vmem:[#allocation9 + $0x88] sm:$0xf]
    %v531 = vld [vmem:[#allocation9 + $0x8c] sm:$0xf]
    %v532 = vld [vmem:[#allocation9 + $0x90] sm:$0xf]
    %v533 = vld [vmem:[#allocation9 + $0x94] sm:$0xf]
    %v534 = vld [vmem:[#allocation9 + $0x98] sm:$0xf]
    %v535 = vld [vmem:[#allocation9 + $0x9c] sm:$0xf]
    %v536 = vld [vmem:[#allocation9 + $0xa0] sm:$0xf]
    %v537 = vld [vmem:[#allocation9 + $0xa4] sm:$0xf]
    %v538 = vld [vmem:[#allocation9 + $0xa8] sm:$0xf]
    %v539 = vld [vmem:[#allocation9 + $0xac] sm:$0xf]
    %v540 = vld [vmem:[#allocation9 + $0xb0] sm:$0xf]
    %v541 = vld [vmem:[#allocation9 + $0xb4] sm:$0xf]
    %v542 = vld [vmem:[#allocation9 + $0xb8] sm:$0xf]
    %v543 = vld [vmem:[#allocation9 + $0xbc] sm:$0xf]
    %v544 = vld [vmem:[%s5] sm:$0x1]
    %v546 = vlaneseq
    %v547 = vshrl.u32 %v546, 7
    %v548 = vsub.s32 0, %v547
    %v549 = vrot.slane %v544, %v548
    %v599 = vunpack.c.l.b16 %v496
    %v600 = vunpack.c.l.b16 %v497
    %v601 = vunpack.c.l.b16 %v498
    %v602 = vunpack.c.l.b16 %v499
    %v603 = vunpack.c.l.b16 %v500
    %v604 = vunpack.c.l.b16 %v501
    %v605 = vunpack.c.l.b16 %v502
    %v606 = vunpack.c.l.b16 %v503
    %v607 = vunpack.c.l.b16 %v504
    %v608 = vunpack.c.l.b16 %v505
    %v609 = vunpack.c.l.b16 %v506
    %v610 = vunpack.c.l.b16 %v507
    %v611 = vunpack.c.l.b16 %v508
    %v612 = vunpack.c.l.b16 %v509
    %v613 = vunpack.c.l.b16 %v510
    %v614 = vunpack.c.l.b16 %v511
    %v615 = vunpack.c.l.b16 %v512
    %v616 = vunpack.c.l.b16 %v513
    %v617 = vunpack.c.l.b16 %v514
    %v618 = vunpack.c.l.b16 %v515
    %v619 = vunpack.c.l.b16 %v516
    %v620 = vunpack.c.l.b16 %v517
    %v621 = vunpack.c.l.b16 %v518
    %v622 = vunpack.c.l.b16 %v519
    %v623 = vunpack.c.l.b16 %v520
    %v624 = vunpack.c.l.b16 %v521
    %v625 = vunpack.c.l.b16 %v522
    %v626 = vunpack.c.l.b16 %v523
    %v627 = vunpack.c.l.b16 %v524
    %v628 = vunpack.c.l.b16 %v525
    %v629 = vunpack.c.l.b16 %v526
    %v630 = vunpack.c.l.b16 %v527
    %v631 = vunpack.c.l.b16 %v528
    %v632 = vunpack.c.l.b16 %v529
    %v633 = vunpack.c.l.b16 %v530
    %v634 = vunpack.c.l.b16 %v531
    %v635 = vunpack.c.l.b16 %v532
    %v636 = vunpack.c.l.b16 %v533
    %v637 = vunpack.c.l.b16 %v534
    %v638 = vunpack.c.l.b16 %v535
    %v639 = vunpack.c.l.b16 %v536
    %v640 = vunpack.c.l.b16 %v537
    %v641 = vunpack.c.l.b16 %v538
    %v642 = vunpack.c.l.b16 %v539
    %v643 = vunpack.c.l.b16 %v540
    %v644 = vunpack.c.l.b16 %v541
    %v645 = vunpack.c.l.b16 %v542
    %v646 = vunpack.c.l.b16 %v543
    %v647 = vpack.c.b16 %v600, %v599
    %v648 = vpack.c.b16 %v602, %v601
    %v649 = vpack.c.b16 %v604, %v603
    %v650 = vpack.c.b16 %v606, %v605
    %v651 = vpack.c.b16 %v608, %v607
    %v652 = vpack.c.b16 %v610, %v609
    %v653 = vpack.c.b16 %v612, %v611
    %v654 = vpack.c.b16 %v614, %v613
    %v655 = vpack.c.b16 %v616, %v615
    %v656 = vpack.c.b16 %v618, %v617
    %v657 = vpack.c.b16 %v620, %v619
    %v658 = vpack.c.b16 %v622, %v621
    %v659 = vpack.c.b16 %v624, %v623
    %v660 = vpack.c.b16 %v626, %v625
    %v661 = vpack.c.b16 %v628, %v627
    %v662 = vpack.c.b16 %v630, %v629
    %v663 = vpack.c.b16 %v632, %v631
    %v664 = vpack.c.b16 %v634, %v633
    %v665 = vpack.c.b16 %v636, %v635
    %v666 = vpack.c.b16 %v638, %v637
    %v667 = vpack.c.b16 %v640, %v639
    %v668 = vpack.c.b16 %v642, %v641
    %v669 = vpack.c.b16 %v644, %v643
    %v670 = vpack.c.b16 %v646, %v645
    %695 = vmatprep.subr.bf16.mxu0 0
    %696 = vmatpush1.bf16.msra.mxu0 %v654
    %697 = vmatprep.subr.bf16.mxu0 0
    %698 = vmatpush1.bf16.msra.mxu0 %v653
    %699 = vmatprep.subr.bf16.mxu0 0
    %700 = vmatpush1.bf16.msra.mxu0 %v652
    %701 = vmatprep.subr.bf16.mxu0 0
    %702 = vmatpush1.bf16.msra.mxu0 %v651
    %703 = vmatprep.subr.bf16.mxu0 0
    %704 = vmatpush1.bf16.msra.mxu0 %v650
    %705 = vmatprep.subr.bf16.mxu0 0
    %706 = vmatpush1.bf16.msra.mxu0 %v649
    %707 = vmatprep.subr.bf16.mxu0 0
    %708 = vmatpush1.bf16.msra.mxu0 %v648
    %709 = vmatprep.subr.bf16.mxu0 0
    %710 = vmatpush1.bf16.msra.mxu0 %v647
    %711 = vmatprep.subr.bf16.mxu0 0
    %712 = vmatpush2.bf16.msra.mxu0 %v662
    %713 = vmatprep.subr.bf16.mxu0 0
    %714 = vmatpush2.bf16.msra.mxu0 %v661
    %715 = vmatprep.subr.bf16.mxu0 0
    %716 = vmatpush2.bf16.msra.mxu0 %v660
    %717 = vmatprep.subr.bf16.mxu0 0
    %718 = vmatpush2.bf16.msra.mxu0 %v659
    %719 = vmatprep.subr.bf16.mxu0 0
    %720 = vmatpush2.bf16.msra.mxu0 %v658
    %721 = vmatprep.subr.bf16.mxu0 0
    %722 = vmatpush2.bf16.msra.mxu0 %v657
    %723 = vmatprep.subr.bf16.mxu0 0
    %724 = vmatpush2.bf16.msra.mxu0 %v656
    %725 = vmatprep.subr.bf16.mxu0 0
    %726 = vmatpush2.bf16.msra.mxu0 %v655
    %727 = vmatprep.mubr.bf16.mxu0 %v494
    %728 = vmatmul.mubr.bf16.gmra.mxu0 %v493
    %v729 = vpop.f32.mrf.mxu0
    %v730 = vadd.f32 %v549, %v729
    %v731 = vpop.f32.mrf.mxu0
    %v732 = vpop.f32.mrf.mxu0
    %v733 = vadd.f32 %v549, %v732
    %v734 = vpop.f32.mrf.mxu0
    %735 = vdwg.mxu0
    %736 = vmatprep.subr.bf16.mxu0 0
    %737 = vmatpush1.bf16.msra.mxu0 %v670
    %738 = vmatprep.subr.bf16.mxu0 0
    %739 = vmatpush1.bf16.msra.mxu0 %v669
    %740 = vmatprep.subr.bf16.mxu0 0
    %741 = vmatpush1.bf16.msra.mxu0 %v668
    %742 = vmatprep.subr.bf16.mxu0 0
    %743 = vmatpush1.bf16.msra.mxu0 %v667
    %744 = vmatprep.subr.bf16.mxu0 0
    %745 = vmatpush1.bf16.msra.mxu0 %v666
    %746 = vmatprep.subr.bf16.mxu0 0
    %747 = vmatpush1.bf16.msra.mxu0 %v665
    %748 = vmatprep.subr.bf16.mxu0 0
    %749 = vmatpush1.bf16.msra.mxu0 %v664
    %750 = vmatprep.subr.bf16.mxu0 0
    %751 = vmatpush1.bf16.msra.mxu0 %v663
    %752 = vmatprep.subr.bf16.mxu0 0
    %753 = vmatpush2.bf16.msra.mxu0 0
    %754 = vmatprep.subr.bf16.mxu0 0
    %755 = vmatpush2.bf16.msra.mxu0 0
    %756 = vmatprep.subr.bf16.mxu0 0
    %757 = vmatpush2.bf16.msra.mxu0 0
    %758 = vmatprep.subr.bf16.mxu0 0
    %759 = vmatpush2.bf16.msra.mxu0 0
    %760 = vmatprep.subr.bf16.mxu0 0
    %761 = vmatpush2.bf16.msra.mxu0 0
    %762 = vmatprep.subr.bf16.mxu0 0
    %763 = vmatpush2.bf16.msra.mxu0 0
    %764 = vmatprep.subr.bf16.mxu0 0
    %765 = vmatpush2.bf16.msra.mxu0 0
    %766 = vmatprep.subr.bf16.mxu0 0
    %767 = vmatpush2.bf16.msra.mxu0 0
    %768 = vmatprep.mubr.bf16.mxu0 0
    %769 = vmatmul.mubr.bf16.gmra.mxu0 %v495
    %v770 = vpop.f32.mrf.mxu0
    %v771 = vadd.f32 %v730, %v770
    %v772 = vpop.f32.mrf.mxu0
    %v773 = vpop.f32.mrf.mxu0
    %v774 = vadd.f32 %v733, %v773
    %v775 = vpop.f32.mrf.mxu0
    %776 = vdwg.mxu0
    %vm777 = vcmp.ge.f32.partialorder %v771, 0.0
    %vm778 = vcmp.ge.f32.partialorder %v774, 0.0
    %v779 = vstv %s480
    %v780 = vmul.f32 %v779, %v771
    %v781 = vmul.f32 %v779, %v774
    %v782 = vsel %vm777, %v771, %v780
    %v783 = vsel %vm778, %v774, %v781
    %s784 = sld [smem:[#allocation14 + $0x2]]
    %v785 = vrot.slane %v782, 7
    %v786 = vrot.slane %v783, 7
    %v787 = vsel %vm169, %v785, %v786
    %v788 = vsel %vm169, %v786, %v785
    %v789 = vsel %vm174, %v788, 0.0
    %v790 = vsel %vm175, %v787, 0.0
    %v791 = vrot.slane %v782, 1
    %v792 = vrot.slane %v783, 1
    %v793 = vsel %vm180, %v791, %v792
    %v794 = vsel %vm180, %v792, %v791
    %v795 = vsel %vm185, %v793, 0.0
    %v796 = vsel %vm186, %v794, 0.0
    %v797 = vpack.c.bf16 %v790, %v789
    %v798 = vpack.c.bf16 %v783, %v782
    %v799 = vpack.c.bf16 %v796, %v795
    %v800 = vld [vmem:[#allocation11] sm:$0xff]
    %v801 = vld [vmem:[#allocation11 + $0x8] sm:$0xff]
    %v802 = vld [vmem:[#allocation11 + $0x10] sm:$0xff]
    %v803 = vld [vmem:[#allocation11 + $0x18] sm:$0xff]
    %v804 = vld [vmem:[#allocation11 + $0x20] sm:$0xff]
    %v805 = vld [vmem:[#allocation11 + $0x28] sm:$0xff]
    %v806 = vld [vmem:[#allocation11 + $0x30] sm:$0xff]
    %v807 = vld [vmem:[#allocation11 + $0x38] sm:$0xff]
    %v808 = vld [vmem:[#allocation11 + $0x40] sm:$0xff]
    %v809 = vld [vmem:[#allocation11 + $0x48] sm:$0xff]
    %v810 = vld [vmem:[#allocation11 + $0x50] sm:$0xff]
    %v811 = vld [vmem:[#allocation11 + $0x58] sm:$0xff]
    %v812 = vld [vmem:[#allocation11 + $0x60] sm:$0xff]
    %v813 = vld [vmem:[#allocation11 + $0x68] sm:$0xff]
    %v814 = vld [vmem:[#allocation11 + $0x70] sm:$0xff]
    %v815 = vld [vmem:[#allocation11 + $0x78] sm:$0xff]
    %v816 = vld [vmem:[#allocation11 + $0x80] sm:$0xff]
    %v817 = vld [vmem:[#allocation11 + $0x88] sm:$0xff]
    %v818 = vld [vmem:[#allocation11 + $0x90] sm:$0xff]
    %v819 = vld [vmem:[#allocation11 + $0x98] sm:$0xff]
    %v820 = vld [vmem:[#allocation11 + $0xa0] sm:$0xff]
    %v821 = vld [vmem:[#allocation11 + $0xa8] sm:$0xff]
    %v822 = vld [vmem:[#allocation11 + $0xb0] sm:$0xff]
    %v823 = vld [vmem:[#allocation11 + $0xb8] sm:$0xff]
    %v824 = vld [vmem:[#allocation11 + $0xc0] sm:$0xff]
    %v825 = vld [vmem:[#allocation11 + $0xc8] sm:$0xff]
    %v826 = vld [vmem:[#allocation11 + $0xd0] sm:$0xff]
    %v827 = vld [vmem:[#allocation11 + $0xd8] sm:$0xff]
    %v828 = vld [vmem:[#allocation11 + $0xe0] sm:$0xff]
    %v829 = vld [vmem:[#allocation11 + $0xe8] sm:$0xff]
    %v830 = vld [vmem:[#allocation11 + $0xf0] sm:$0xff]
    %v831 = vld [vmem:[#allocation11 + $0xf8] sm:$0xff]
    %v832 = vld [vmem:[#allocation11 + $0x100] sm:$0xff]
    %v833 = vld [vmem:[#allocation11 + $0x108] sm:$0xff]
    %v834 = vld [vmem:[#allocation11 + $0x110] sm:$0xff]
    %v835 = vld [vmem:[#allocation11 + $0x118] sm:$0xff]
    %v836 = vld [vmem:[#allocation11 + $0x120] sm:$0xff]
    %v837 = vld [vmem:[#allocation11 + $0x128] sm:$0xff]
    %v838 = vld [vmem:[#allocation11 + $0x130] sm:$0xff]
    %v839 = vld [vmem:[#allocation11 + $0x138] sm:$0xff]
    %v840 = vld [vmem:[#allocation11 + $0x140] sm:$0xff]
    %v841 = vld [vmem:[#allocation11 + $0x148] sm:$0xff]
    %v842 = vld [vmem:[#allocation11 + $0x150] sm:$0xff]
    %v843 = vld [vmem:[#allocation11 + $0x158] sm:$0xff]
    %v844 = vld [vmem:[#allocation11 + $0x160] sm:$0xff]
    %v845 = vld [vmem:[#allocation11 + $0x168] sm:$0xff]
    %v846 = vld [vmem:[#allocation11 + $0x170] sm:$0xff]
    %v847 = vld [vmem:[#allocation11 + $0x178] sm:$0xff]
    %v848 = vld [vmem:[%s7] sm:$0x3]
    %v850 = vlaneseq
    %v851 = vshrl.u32 %v850, 7
    %v852 = vsub.s32 0, %v851
    %v853 = vrot.slane %v848, %v852
    %v854 = vlaneseq
    %v855 = vshrl.u32 %v854, 7
    %v856 = vsub.s32 1, %v855
    %v857 = vrot.slane %v848, %v856
    %v908 = vunpack.c.l.b16 %v800
    %v909 = vunpack.c.h.b16 %v800
    %v910 = vunpack.c.l.b16 %v801
    %v911 = vunpack.c.h.b16 %v801
    %v912 = vunpack.c.l.b16 %v802
    %v913 = vunpack.c.h.b16 %v802
    %v914 = vunpack.c.l.b16 %v803
    %v915 = vunpack.c.h.b16 %v803
    %v916 = vunpack.c.l.b16 %v804
    %v917 = vunpack.c.h.b16 %v804
    %v918 = vunpack.c.l.b16 %v805
    %v919 = vunpack.c.h.b16 %v805
    %v920 = vunpack.c.l.b16 %v806
    %v921 = vunpack.c.h.b16 %v806
    %v922 = vunpack.c.l.b16 %v807
    %v923 = vunpack.c.h.b16 %v807
    %v924 = vunpack.c.l.b16 %v808
    %v925 = vunpack.c.h.b16 %v808
    %v926 = vunpack.c.l.b16 %v809
    %v927 = vunpack.c.h.b16 %v809
    %v928 = vunpack.c.l.b16 %v810
    %v929 = vunpack.c.h.b16 %v810
    %v930 = vunpack.c.l.b16 %v811
    %v931 = vunpack.c.h.b16 %v811
    %v932 = vunpack.c.l.b16 %v812
    %v933 = vunpack.c.h.b16 %v812
    %v934 = vunpack.c.l.b16 %v813
    %v935 = vunpack.c.h.b16 %v813
    %v936 = vunpack.c.l.b16 %v814
    %v937 = vunpack.c.h.b16 %v814
    %v938 = vunpack.c.l.b16 %v815
    %v939 = vunpack.c.h.b16 %v815
    %v940 = vunpack.c.l.b16 %v816
    %v941 = vunpack.c.h.b16 %v816
    %v942 = vunpack.c.l.b16 %v817
    %v943 = vunpack.c.h.b16 %v817
    %v944 = vunpack.c.l.b16 %v818
    %v945 = vunpack.c.h.b16 %v818
    %v946 = vunpack.c.l.b16 %v819
    %v947 = vunpack.c.h.b16 %v819
    %v948 = vunpack.c.l.b16 %v820
    %v949 = vunpack.c.h.b16 %v820
    %v950 = vunpack.c.l.b16 %v821
    %v951 = vunpack.c.h.b16 %v821
    %v952 = vunpack.c.l.b16 %v822
    %v953 = vunpack.c.h.b16 %v822
    %v954 = vunpack.c.l.b16 %v823
    %v955 = vunpack.c.h.b16 %v823
    %v956 = vunpack.c.l.b16 %v824
    %v957 = vunpack.c.h.b16 %v824
    %v958 = vunpack.c.l.b16 %v825
    %v959 = vunpack.c.h.b16 %v825
    %v960 = vunpack.c.l.b16 %v826
    %v961 = vunpack.c.h.b16 %v826
    %v962 = vunpack.c.l.b16 %v827
    %v963 = vunpack.c.h.b16 %v827
    %v964 = vunpack.c.l.b16 %v828
    %v965 = vunpack.c.h.b16 %v828
    %v966 = vunpack.c.l.b16 %v829
    %v967 = vunpack.c.h.b16 %v829
    %v968 = vunpack.c.l.b16 %v830
    %v969 = vunpack.c.h.b16 %v830
    %v970 = vunpack.c.l.b16 %v831
    %v971 = vunpack.c.h.b16 %v831
    %v972 = vunpack.c.l.b16 %v832
    %v973 = vunpack.c.h.b16 %v832
    %v974 = vunpack.c.l.b16 %v833
    %v975 = vunpack.c.h.b16 %v833
    %v976 = vunpack.c.l.b16 %v834
    %v977 = vunpack.c.h.b16 %v834
    %v978 = vunpack.c.l.b16 %v835
    %v979 = vunpack.c.h.b16 %v835
    %v980 = vunpack.c.l.b16 %v836
    %v981 = vunpack.c.h.b16 %v836
    %v982 = vunpack.c.l.b16 %v837
    %v983 = vunpack.c.h.b16 %v837
    %v984 = vunpack.c.l.b16 %v838
    %v985 = vunpack.c.h.b16 %v838
    %v986 = vunpack.c.l.b16 %v839
    %v987 = vunpack.c.h.b16 %v839
    %v988 = vunpack.c.l.b16 %v840
    %v989 = vunpack.c.h.b16 %v840
    %v990 = vunpack.c.l.b16 %v841
    %v991 = vunpack.c.h.b16 %v841
    %v992 = vunpack.c.l.b16 %v842
    %v993 = vunpack.c.h.b16 %v842
    %v994 = vunpack.c.l.b16 %v843
    %v995 = vunpack.c.h.b16 %v843
    %v996 = vunpack.c.l.b16 %v844
    %v997 = vunpack.c.h.b16 %v844
    %v998 = vunpack.c.l.b16 %v845
    %v999 = vunpack.c.h.b16 %v845
    %v1000 = vunpack.c.l.b16 %v846
    %v1001 = vunpack.c.h.b16 %v846
    %v1002 = vunpack.c.l.b16 %v847
    %v1003 = vunpack.c.h.b16 %v847
    %v1004 = vpack.c.b16 %v910, %v908
    %v1005 = vpack.c.b16 %v911, %v909
    %v1006 = vpack.c.b16 %v914, %v912
    %v1007 = vpack.c.b16 %v915, %v913
    %v1008 = vpack.c.b16 %v918, %v916
    %v1009 = vpack.c.b16 %v919, %v917
    %v1010 = vpack.c.b16 %v922, %v920
    %v1011 = vpack.c.b16 %v923, %v921
    %v1012 = vpack.c.b16 %v926, %v924
    %v1013 = vpack.c.b16 %v927, %v925
    %v1014 = vpack.c.b16 %v930, %v928
    %v1015 = vpack.c.b16 %v931, %v929
    %v1016 = vpack.c.b16 %v934, %v932
    %v1017 = vpack.c.b16 %v935, %v933
    %v1018 = vpack.c.b16 %v938, %v936
    %v1019 = vpack.c.b16 %v939, %v937
    %v1020 = vpack.c.b16 %v942, %v940
    %v1021 = vpack.c.b16 %v943, %v941
    %v1022 = vpack.c.b16 %v946, %v944
    %v1023 = vpack.c.b16 %v947, %v945
    %v1024 = vpack.c.b16 %v950, %v948
    %v1025 = vpack.c.b16 %v951, %v949
    %v1026 = vpack.c.b16 %v954, %v952
    %v1027 = vpack.c.b16 %v955, %v953
    %v1028 = vpack.c.b16 %v958, %v956
    %v1029 = vpack.c.b16 %v959, %v957
    %v1030 = vpack.c.b16 %v962, %v960
    %v1031 = vpack.c.b16 %v963, %v961
    %v1032 = vpack.c.b16 %v966, %v964
    %v1033 = vpack.c.b16 %v967, %v965
    %v1034 = vpack.c.b16 %v970, %v968
    %v1035 = vpack.c.b16 %v971, %v969
    %v1036 = vpack.c.b16 %v974, %v972
    %v1037 = vpack.c.b16 %v975, %v973
    %v1038 = vpack.c.b16 %v978, %v976
    %v1039 = vpack.c.b16 %v979, %v977
    %v1040 = vpack.c.b16 %v982, %v980
    %v1041 = vpack.c.b16 %v983, %v981
    %v1042 = vpack.c.b16 %v986, %v984
    %v1043 = vpack.c.b16 %v987, %v985
    %v1044 = vpack.c.b16 %v990, %v988
    %v1045 = vpack.c.b16 %v991, %v989
    %v1046 = vpack.c.b16 %v994, %v992
    %v1047 = vpack.c.b16 %v995, %v993
    %v1048 = vpack.c.b16 %v998, %v996
    %v1049 = vpack.c.b16 %v999, %v997
    %v1050 = vpack.c.b16 %v1002, %v1000
    %v1051 = vpack.c.b16 %v1003, %v1001
    %1100 = vmatprep.subr.bf16.mxu0 %v1019
    %1101 = vmatpush1.bf16.msra.mxu0 %v1018
    %1102 = vmatprep.subr.bf16.mxu0 %v1017
    %1103 = vmatpush1.bf16.msra.mxu0 %v1016
    %1104 = vmatprep.subr.bf16.mxu0 %v1015
    %1105 = vmatpush1.bf16.msra.mxu0 %v1014
    %1106 = vmatprep.subr.bf16.mxu0 %v1013
    %1107 = vmatpush1.bf16.msra.mxu0 %v1012
    %1108 = vmatprep.subr.bf16.mxu0 %v1011
    %1109 = vmatpush1.bf16.msra.mxu0 %v1010
    %1110 = vmatprep.subr.bf16.mxu0 %v1009
    %1111 = vmatpush1.bf16.msra.mxu0 %v1008
    %1112 = vmatprep.subr.bf16.mxu0 %v1007
    %1113 = vmatpush1.bf16.msra.mxu0 %v1006
    %1114 = vmatprep.subr.bf16.mxu0 %v1005
    %1115 = vmatpush1.bf16.msra.mxu0 %v1004
    %1116 = vmatprep.subr.bf16.mxu0 %v1035
    %1117 = vmatpush2.bf16.msra.mxu0 %v1034
    %1118 = vmatprep.subr.bf16.mxu0 %v1033
    %1119 = vmatpush2.bf16.msra.mxu0 %v1032
    %1120 = vmatprep.subr.bf16.mxu0 %v1031
    %1121 = vmatpush2.bf16.msra.mxu0 %v1030
    %1122 = vmatprep.subr.bf16.mxu0 %v1029
    %1123 = vmatpush2.bf16.msra.mxu0 %v1028
    %1124 = vmatprep.subr.bf16.mxu0 %v1027
    %1125 = vmatpush2.bf16.msra.mxu0 %v1026
    %1126 = vmatprep.subr.bf16.mxu0 %v1025
    %1127 = vmatpush2.bf16.msra.mxu0 %v1024
    %1128 = vmatprep.subr.bf16.mxu0 %v1023
    %1129 = vmatpush2.bf16.msra.mxu0 %v1022
    %1130 = vmatprep.subr.bf16.mxu0 %v1021
    %1131 = vmatpush2.bf16.msra.mxu0 %v1020
    %1132 = vmatprep.mubr.bf16.mxu0 %v798
    %1133 = vmatmul.mubr.bf16.gmra.mxu0 %v797
    %v1134 = vpop.f32.mrf.mxu0
    %v1135 = vadd.f32 %v853, %v1134
    %v1136 = vpop.f32.mrf.mxu0
    %v1137 = vadd.f32 %v857, %v1136
    %v1138 = vpop.f32.mrf.mxu0
    %v1139 = vadd.f32 %v853, %v1138
    %v1140 = vpop.f32.mrf.mxu0
    %v1141 = vadd.f32 %v857, %v1140
    %1142 = vdwg.mxu0
    %1143 = vmatprep.subr.bf16.mxu0 %v1051
    %1144 = vmatpush1.bf16.msra.mxu0 %v1050
    %1145 = vmatprep.subr.bf16.mxu0 %v1049
    %1146 = vmatpush1.bf16.msra.mxu0 %v1048
    %1147 = vmatprep.subr.bf16.mxu0 %v1047
    %1148 = vmatpush1.bf16.msra.mxu0 %v1046
    %1149 = vmatprep.subr.bf16.mxu0 %v1045
    %1150 = vmatpush1.bf16.msra.mxu0 %v1044
    %1151 = vmatprep.subr.bf16.mxu0 %v1043
    %1152 = vmatpush1.bf16.msra.mxu0 %v1042
    %1153 = vmatprep.subr.bf16.mxu0 %v1041
    %1154 = vmatpush1.bf16.msra.mxu0 %v1040
    %1155 = vmatprep.subr.bf16.mxu0 %v1039
    %1156 = vmatpush1.bf16.msra.mxu0 %v1038
    %1157 = vmatprep.subr.bf16.mxu0 %v1037
    %1158 = vmatpush1.bf16.msra.mxu0 %v1036
    %1159 = vmatprep.subr.bf16.mxu0 0
    %1160 = vmatpush2.bf16.msra.mxu0 0
    %1161 = vmatprep.subr.bf16.mxu0 0
    %1162 = vmatpush2.bf16.msra.mxu0 0
    %1163 = vmatprep.subr.bf16.mxu0 0
    %1164 = vmatpush2.bf16.msra.mxu0 0
    %1165 = vmatprep.subr.bf16.mxu0 0
    %1166 = vmatpush2.bf16.msra.mxu0 0
    %1167 = vmatprep.subr.bf16.mxu0 0
    %1168 = vmatpush2.bf16.msra.mxu0 0
    %1169 = vmatprep.subr.bf16.mxu0 0
    %1170 = vmatpush2.bf16.msra.mxu0 0
    %1171 = vmatprep.subr.bf16.mxu0 0
    %1172 = vmatpush2.bf16.msra.mxu0 0
    %1173 = vmatprep.subr.bf16.mxu0 0
    %1174 = vmatpush2.bf16.msra.mxu0 0
    %1175 = vmatprep.mubr.bf16.mxu0 0
    %1176 = vmatmul.mubr.bf16.gmra.mxu0 %v799
    %v1177 = vpop.f32.mrf.mxu0
    %v1178 = vadd.f32 %v1135, %v1177
    %v1179 = vpop.f32.mrf.mxu0
    %v1180 = vadd.f32 %v1137, %v1179
    %v1181 = vpop.f32.mrf.mxu0
    %v1182 = vadd.f32 %v1139, %v1181
    %v1183 = vpop.f32.mrf.mxu0
    %v1184 = vadd.f32 %v1141, %v1183
    %1185 = vdwg.mxu0
    %vm1186 = vcmp.ge.f32.partialorder %v1178, 0.0
    %vm1187 = vcmp.ge.f32.partialorder %v1180, 0.0
    %vm1188 = vcmp.ge.f32.partialorder %v1182, 0.0
    %vm1189 = vcmp.ge.f32.partialorder %v1184, 0.0
    %v1190 = vstv %s784
    %v1191 = vmul.f32 %v1190, %v1178
    %v1192 = vmul.f32 %v1190, %v1180
    %v1193 = vmul.f32 %v1190, %v1182
    %v1194 = vmul.f32 %v1190, %v1184
    %v1195 = vsel %vm1186, %v1178, %v1191
    %v1196 = vsel %vm1187, %v1180, %v1192
    %v1197 = vsel %vm1188, %v1182, %v1193
    %v1198 = vsel %vm1189, %v1184, %v1194
    %s1199 = sld [smem:[#allocation14 + $0x3]]
    %v1200 = vrot.slane %v1195, 7
    %v1201 = vrot.slane %v1196, 7
    %v1202 = vrot.slane %v1197, 7
    %v1203 = vrot.slane %v1198, 7
    %v1204 = vsel %vm169, %v1200, %v1202
    %v1205 = vsel %vm169, %v1201, %v1203
    %v1206 = vsel %vm169, %v1202, %v1200
    %v1207 = vsel %vm169, %v1203, %v1201
    %v1208 = vsel %vm174, %v1206, 0.0
    %v1209 = vsel %vm174, %v1207, 0.0
    %v1210 = vsel %vm175, %v1204, 0.0
    %v1211 = vsel %vm175, %v1205, 0.0
    %v1212 = vrot.slane %v1195, 1
    %v1213 = vrot.slane %v1196, 1
    %v1214 = vrot.slane %v1197, 1
    %v1215 = vrot.slane %v1198, 1
    %v1216 = vsel %vm180, %v1212, %v1214
    %v1217 = vsel %vm180, %v1213, %v1215
    %v1218 = vsel %vm180, %v1214, %v1212
    %v1219 = vsel %vm180, %v1215, %v1213
    %v1220 = vsel %vm185, %v1216, 0.0
    %v1221 = vsel %vm185, %v1217, 0.0
    %v1222 = vsel %vm186, %v1218, 0.0
    %v1223 = vsel %vm186, %v1219, 0.0
    %v1224 = vpack.c.bf16 %v1210, %v1208
    %v1225 = vpack.c.bf16 %v1211, %v1209
    %v1226 = vpack.c.bf16 %v1197, %v1195
    %v1227 = vpack.c.bf16 %v1198, %v1196
    %v1228 = vpack.c.bf16 %v1222, %v1220
    %v1229 = vpack.c.bf16 %v1223, %v1221
    %v1230 = vld [vmem:[#allocation12] sm:$0xff]
    %v1231 = vld [vmem:[#allocation12 + $0x8] sm:$0xff]
    %v1232 = vld [vmem:[#allocation12 + $0x10] sm:$0xff]
    %v1233 = vld [vmem:[#allocation12 + $0x18] sm:$0xff]
    %v1234 = vld [vmem:[#allocation12 + $0x20] sm:$0xff]
    %v1235 = vld [vmem:[#allocation12 + $0x28] sm:$0xff]
    %v1236 = vld [vmem:[#allocation12 + $0x30] sm:$0xff]
    %v1237 = vld [vmem:[#allocation12 + $0x38] sm:$0xff]
    %v1238 = vld [vmem:[#allocation12 + $0x40] sm:$0xff]
    %v1239 = vld [vmem:[#allocation12 + $0x48] sm:$0xff]
    %v1240 = vld [vmem:[#allocation12 + $0x50] sm:$0xff]
    %v1241 = vld [vmem:[#allocation12 + $0x58] sm:$0xff]
    %v1242 = vld [vmem:[#allocation12 + $0x60] sm:$0xff]
    %v1243 = vld [vmem:[#allocation12 + $0x68] sm:$0xff]
    %v1244 = vld [vmem:[#allocation12 + $0x70] sm:$0xff]
    %v1245 = vld [vmem:[#allocation12 + $0x78] sm:$0xff]
    %v1246 = vld [vmem:[#allocation12 + $0x80] sm:$0xff]
    %v1247 = vld [vmem:[#allocation12 + $0x88] sm:$0xff]
    %v1248 = vld [vmem:[#allocation12 + $0x90] sm:$0xff]
    %v1249 = vld [vmem:[#allocation12 + $0x98] sm:$0xff]
    %v1250 = vld [vmem:[#allocation12 + $0xa0] sm:$0xff]
    %v1251 = vld [vmem:[#allocation12 + $0xa8] sm:$0xff]
    %v1252 = vld [vmem:[#allocation12 + $0xb0] sm:$0xff]
    %v1253 = vld [vmem:[#allocation12 + $0xb8] sm:$0xff]
    %v1254 = vld [vmem:[#allocation12 + $0xc0] sm:$0xff]
    %v1255 = vld [vmem:[#allocation12 + $0xc8] sm:$0xff]
    %v1256 = vld [vmem:[#allocation12 + $0xd0] sm:$0xff]
    %v1257 = vld [vmem:[#allocation12 + $0xd8] sm:$0xff]
    %v1258 = vld [vmem:[#allocation12 + $0xe0] sm:$0xff]
    %v1259 = vld [vmem:[#allocation12 + $0xe8] sm:$0xff]
    %v1260 = vld [vmem:[#allocation12 + $0xf0] sm:$0xff]
    %v1261 = vld [vmem:[#allocation12 + $0xf8] sm:$0xff]
    %v1262 = vld [vmem:[#allocation12 + $0x100] sm:$0xff]
    %v1263 = vld [vmem:[#allocation12 + $0x108] sm:$0xff]
    %v1264 = vld [vmem:[#allocation12 + $0x110] sm:$0xff]
    %v1265 = vld [vmem:[#allocation12 + $0x118] sm:$0xff]
    %v1266 = vld [vmem:[#allocation12 + $0x120] sm:$0xff]
    %v1267 = vld [vmem:[#allocation12 + $0x128] sm:$0xff]
    %v1268 = vld [vmem:[#allocation12 + $0x130] sm:$0xff]
    %v1269 = vld [vmem:[#allocation12 + $0x138] sm:$0xff]
    %v1270 = vld [vmem:[#allocation12 + $0x140] sm:$0xff]
    %v1271 = vld [vmem:[#allocation12 + $0x148] sm:$0xff]
    %v1272 = vld [vmem:[#allocation12 + $0x150] sm:$0xff]
    %v1273 = vld [vmem:[#allocation12 + $0x158] sm:$0xff]
    %v1274 = vld [vmem:[#allocation12 + $0x160] sm:$0xff]
    %v1275 = vld [vmem:[#allocation12 + $0x168] sm:$0xff]
    %v1276 = vld [vmem:[#allocation12 + $0x170] sm:$0xff]
    %v1277 = vld [vmem:[#allocation12 + $0x178] sm:$0xff]
    %v1278 = vld [vmem:[#allocation12 + $0x180] sm:$0xff]
    %v1279 = vld [vmem:[#allocation12 + $0x188] sm:$0xff]
    %v1280 = vld [vmem:[#allocation12 + $0x190] sm:$0xff]
    %v1281 = vld [vmem:[#allocation12 + $0x198] sm:$0xff]
    %v1282 = vld [vmem:[#allocation12 + $0x1a0] sm:$0xff]
    %v1283 = vld [vmem:[#allocation12 + $0x1a8] sm:$0xff]
    %v1284 = vld [vmem:[#allocation12 + $0x1b0] sm:$0xff]
    %v1285 = vld [vmem:[#allocation12 + $0x1b8] sm:$0xff]
    %v1286 = vld [vmem:[#allocation12 + $0x1c0] sm:$0xff]
    %v1287 = vld [vmem:[#allocation12 + $0x1c8] sm:$0xff]
    %v1288 = vld [vmem:[#allocation12 + $0x1d0] sm:$0xff]
    %v1289 = vld [vmem:[#allocation12 + $0x1d8] sm:$0xff]
    %v1290 = vld [vmem:[#allocation12 + $0x1e0] sm:$0xff]
    %v1291 = vld [vmem:[#allocation12 + $0x1e8] sm:$0xff]
    %v1292 = vld [vmem:[#allocation12 + $0x1f0] sm:$0xff]
    %v1293 = vld [vmem:[#allocation12 + $0x1f8] sm:$0xff]
    %v1294 = vld [vmem:[#allocation12 + $0x200] sm:$0xff]
    %v1295 = vld [vmem:[#allocation12 + $0x208] sm:$0xff]
    %v1296 = vld [vmem:[#allocation12 + $0x210] sm:$0xff]
    %v1297 = vld [vmem:[#allocation12 + $0x218] sm:$0xff]
    %v1298 = vld [vmem:[#allocation12 + $0x220] sm:$0xff]
    %v1299 = vld [vmem:[#allocation12 + $0x228] sm:$0xff]
    %v1300 = vld [vmem:[#allocation12 + $0x230] sm:$0xff]
    %v1301 = vld [vmem:[#allocation12 + $0x238] sm:$0xff]
    %v1302 = vld [vmem:[#allocation12 + $0x240] sm:$0xff]
    %v1303 = vld [vmem:[#allocation12 + $0x248] sm:$0xff]
    %v1304 = vld [vmem:[#allocation12 + $0x250] sm:$0xff]
    %v1305 = vld [vmem:[#allocation12 + $0x258] sm:$0xff]
    %v1306 = vld [vmem:[#allocation12 + $0x260] sm:$0xff]
    %v1307 = vld [vmem:[#allocation12 + $0x268] sm:$0xff]
    %v1308 = vld [vmem:[#allocation12 + $0x270] sm:$0xff]
    %v1309 = vld [vmem:[#allocation12 + $0x278] sm:$0xff]
    %v1310 = vld [vmem:[#allocation12 + $0x280] sm:$0xff]
    %v1311 = vld [vmem:[#allocation12 + $0x288] sm:$0xff]
    %v1312 = vld [vmem:[#allocation12 + $0x290] sm:$0xff]
    %v1313 = vld [vmem:[#allocation12 + $0x298] sm:$0xff]
    %v1314 = vld [vmem:[#allocation12 + $0x2a0] sm:$0xff]
    %v1315 = vld [vmem:[#allocation12 + $0x2a8] sm:$0xff]
    %v1316 = vld [vmem:[#allocation12 + $0x2b0] sm:$0xff]
    %v1317 = vld [vmem:[#allocation12 + $0x2b8] sm:$0xff]
    %v1318 = vld [vmem:[#allocation12 + $0x2c0] sm:$0xff]
    %v1319 = vld [vmem:[#allocation12 + $0x2c8] sm:$0xff]
    %v1320 = vld [vmem:[#allocation12 + $0x2d0] sm:$0xff]
    %v1321 = vld [vmem:[#allocation12 + $0x2d8] sm:$0xff]
    %v1322 = vld [vmem:[#allocation12 + $0x2e0] sm:$0xff]
    %v1323 = vld [vmem:[#allocation12 + $0x2e8] sm:$0xff]
    %v1324 = vld [vmem:[#allocation12 + $0x2f0] sm:$0xff]
    %v1325 = vld [vmem:[#allocation12 + $0x2f8] sm:$0xff]
    %v1326 = vld [vmem:[#allocation12 + $0x300] sm:$0xff]
    %v1327 = vld [vmem:[#allocation12 + $0x308] sm:$0xff]
    %v1328 = vld [vmem:[#allocation12 + $0x310] sm:$0xff]
    %v1329 = vld [vmem:[#allocation12 + $0x318] sm:$0xff]
    %v1330 = vld [vmem:[#allocation12 + $0x320] sm:$0xff]
    %v1331 = vld [vmem:[#allocation12 + $0x328] sm:$0xff]
    %v1332 = vld [vmem:[#allocation12 + $0x330] sm:$0xff]
    %v1333 = vld [vmem:[#allocation12 + $0x338] sm:$0xff]
    %v1334 = vld [vmem:[#allocation12 + $0x340] sm:$0xff]
    %v1335 = vld [vmem:[#allocation12 + $0x348] sm:$0xff]
    %v1336 = vld [vmem:[#allocation12 + $0x350] sm:$0xff]
    %v1337 = vld [vmem:[#allocation12 + $0x358] sm:$0xff]
    %v1338 = vld [vmem:[#allocation12 + $0x360] sm:$0xff]
    %v1339 = vld [vmem:[#allocation12 + $0x368] sm:$0xff]
    %v1340 = vld [vmem:[#allocation12 + $0x370] sm:$0xff]
    %v1341 = vld [vmem:[#allocation12 + $0x378] sm:$0xff]
    %v1342 = vld [vmem:[#allocation12 + $0x380] sm:$0xff]
    %v1343 = vld [vmem:[#allocation12 + $0x388] sm:$0xff]
    %v1344 = vld [vmem:[#allocation12 + $0x390] sm:$0xff]
    %v1345 = vld [vmem:[#allocation12 + $0x398] sm:$0xff]
    %v1346 = vld [vmem:[#allocation12 + $0x3a0] sm:$0xff]
    %v1347 = vld [vmem:[#allocation12 + $0x3a8] sm:$0xff]
    %v1348 = vld [vmem:[#allocation12 + $0x3b0] sm:$0xff]
    %v1349 = vld [vmem:[#allocation12 + $0x3b8] sm:$0xff]
    %v1350 = vld [vmem:[#allocation12 + $0x3c0] sm:$0xff]
    %v1351 = vld [vmem:[#allocation12 + $0x3c8] sm:$0xff]
    %v1352 = vld [vmem:[#allocation12 + $0x3d0] sm:$0xff]
    %v1353 = vld [vmem:[#allocation12 + $0x3d8] sm:$0xff]
    %v1354 = vld [vmem:[#allocation12 + $0x3e0] sm:$0xff]
    %v1355 = vld [vmem:[#allocation12 + $0x3e8] sm:$0xff]
    %v1356 = vld [vmem:[#allocation12 + $0x3f0] sm:$0xff]
    %v1357 = vld [vmem:[#allocation12 + $0x3f8] sm:$0xff]
    %v1358 = vld [vmem:[#allocation12 + $0x400] sm:$0xff]
    %v1359 = vld [vmem:[#allocation12 + $0x408] sm:$0xff]
    %v1360 = vld [vmem:[#allocation12 + $0x410] sm:$0xff]
    %v1361 = vld [vmem:[#allocation12 + $0x418] sm:$0xff]
    %v1362 = vld [vmem:[#allocation12 + $0x420] sm:$0xff]
    %v1363 = vld [vmem:[#allocation12 + $0x428] sm:$0xff]
    %v1364 = vld [vmem:[#allocation12 + $0x430] sm:$0xff]
    %v1365 = vld [vmem:[#allocation12 + $0x438] sm:$0xff]
    %v1366 = vld [vmem:[#allocation12 + $0x440] sm:$0xff]
    %v1367 = vld [vmem:[#allocation12 + $0x448] sm:$0xff]
    %v1368 = vld [vmem:[#allocation12 + $0x450] sm:$0xff]
    %v1369 = vld [vmem:[#allocation12 + $0x458] sm:$0xff]
    %v1370 = vld [vmem:[#allocation12 + $0x460] sm:$0xff]
    %v1371 = vld [vmem:[#allocation12 + $0x468] sm:$0xff]
    %v1372 = vld [vmem:[#allocation12 + $0x470] sm:$0xff]
    %v1373 = vld [vmem:[#allocation12 + $0x478] sm:$0xff]
    %v1374 = vld [vmem:[#allocation12 + $0x480] sm:$0xff]
    %v1375 = vld [vmem:[#allocation12 + $0x488] sm:$0xff]
    %v1376 = vld [vmem:[#allocation12 + $0x490] sm:$0xff]
    %v1377 = vld [vmem:[#allocation12 + $0x498] sm:$0xff]
    %v1378 = vld [vmem:[#allocation12 + $0x4a0] sm:$0xff]
    %v1379 = vld [vmem:[#allocation12 + $0x4a8] sm:$0xff]
    %v1380 = vld [vmem:[#allocation12 + $0x4b0] sm:$0xff]
    %v1381 = vld [vmem:[#allocation12 + $0x4b8] sm:$0xff]
    %v1382 = vld [vmem:[#allocation12 + $0x4c0] sm:$0xff]
    %v1383 = vld [vmem:[#allocation12 + $0x4c8] sm:$0xff]
    %v1384 = vld [vmem:[#allocation12 + $0x4d0] sm:$0xff]
    %v1385 = vld [vmem:[#allocation12 + $0x4d8] sm:$0xff]
    %v1386 = vld [vmem:[#allocation12 + $0x4e0] sm:$0xff]
    %v1387 = vld [vmem:[#allocation12 + $0x4e8] sm:$0xff]
    %v1388 = vld [vmem:[#allocation12 + $0x4f0] sm:$0xff]
    %v1389 = vld [vmem:[#allocation12 + $0x4f8] sm:$0xff]
    %v1390 = vld [vmem:[#allocation12 + $0x500] sm:$0xff]
    %v1391 = vld [vmem:[#allocation12 + $0x508] sm:$0xff]
    %v1392 = vld [vmem:[#allocation12 + $0x510] sm:$0xff]
    %v1393 = vld [vmem:[#allocation12 + $0x518] sm:$0xff]
    %v1394 = vld [vmem:[#allocation12 + $0x520] sm:$0xff]
    %v1395 = vld [vmem:[#allocation12 + $0x528] sm:$0xff]
    %v1396 = vld [vmem:[#allocation12 + $0x530] sm:$0xff]
    %v1397 = vld [vmem:[#allocation12 + $0x538] sm:$0xff]
    %v1398 = vld [vmem:[#allocation12 + $0x540] sm:$0xff]
    %v1399 = vld [vmem:[#allocation12 + $0x548] sm:$0xff]
    %v1400 = vld [vmem:[#allocation12 + $0x550] sm:$0xff]
    %v1401 = vld [vmem:[#allocation12 + $0x558] sm:$0xff]
    %v1402 = vld [vmem:[#allocation12 + $0x560] sm:$0xff]
    %v1403 = vld [vmem:[#allocation12 + $0x568] sm:$0xff]
    %v1404 = vld [vmem:[#allocation12 + $0x570] sm:$0xff]
    %v1405 = vld [vmem:[#allocation12 + $0x578] sm:$0xff]
    %v1406 = vld [vmem:[#allocation12 + $0x580] sm:$0xff]
    %v1407 = vld [vmem:[#allocation12 + $0x588] sm:$0xff]
    %v1408 = vld [vmem:[#allocation12 + $0x590] sm:$0xff]
    %v1409 = vld [vmem:[#allocation12 + $0x598] sm:$0xff]
    %v1410 = vld [vmem:[#allocation12 + $0x5a0] sm:$0xff]
    %v1411 = vld [vmem:[#allocation12 + $0x5a8] sm:$0xff]
    %v1412 = vld [vmem:[#allocation12 + $0x5b0] sm:$0xff]
    %v1413 = vld [vmem:[#allocation12 + $0x5b8] sm:$0xff]
    %v1414 = vld [vmem:[#allocation12 + $0x5c0] sm:$0xff]
    %v1415 = vld [vmem:[#allocation12 + $0x5c8] sm:$0xff]
    %v1416 = vld [vmem:[#allocation12 + $0x5d0] sm:$0xff]
    %v1417 = vld [vmem:[#allocation12 + $0x5d8] sm:$0xff]
    %v1418 = vld [vmem:[#allocation12 + $0x5e0] sm:$0xff]
    %v1419 = vld [vmem:[#allocation12 + $0x5e8] sm:$0xff]
    %v1420 = vld [vmem:[#allocation12 + $0x5f0] sm:$0xff]
    %v1421 = vld [vmem:[#allocation12 + $0x5f8] sm:$0xff]
    %v1422 = vld [vmem:[%s9] sm:$0xf]
    %v1424 = vlaneseq
    %v1425 = vshrl.u32 %v1424, 7
    %v1426 = vsub.s32 0, %v1425
    %v1427 = vrot.slane %v1422, %v1426
    %v1428 = vlaneseq
    %v1429 = vshrl.u32 %v1428, 7
    %v1430 = vsub.s32 1, %v1429
    %v1431 = vrot.slane %v1422, %v1430
    %v1432 = vlaneseq
    %v1433 = vshrl.u32 %v1432, 7
    %v1434 = vsub.s32 2, %v1433
    %v1435 = vrot.slane %v1422, %v1434
    %v1436 = vlaneseq
    %v1437 = vshrl.u32 %v1436, 7
    %v1438 = vsub.s32 3, %v1437
    %v1439 = vrot.slane %v1422, %v1438
    %v1636 = vunpack.c.l.b16 %v1230
    %v1637 = vunpack.c.h.b16 %v1230
    %v1638 = vunpack.c.l.b16 %v1231
    %v1639 = vunpack.c.h.b16 %v1231
    %v1640 = vunpack.c.l.b16 %v1232
    %v1641 = vunpack.c.h.b16 %v1232
    %v1642 = vunpack.c.l.b16 %v1233
    %v1643 = vunpack.c.h.b16 %v1233
    %v1644 = vunpack.c.l.b16 %v1234
    %v1645 = vunpack.c.h.b16 %v1234
    %v1646 = vunpack.c.l.b16 %v1235
    %v1647 = vunpack.c.h.b16 %v1235
    %v1648 = vunpack.c.l.b16 %v1236
    %v1649 = vunpack.c.h.b16 %v1236
    %v1650 = vunpack.c.l.b16 %v1237
    %v1651 = vunpack.c.h.b16 %v1237
    %v1652 = vunpack.c.l.b16 %v1238
    %v1653 = vunpack.c.h.b16 %v1238
    %v1654 = vunpack.c.l.b16 %v1239
    %v1655 = vunpack.c.h.b16 %v1239
    %v1656 = vunpack.c.l.b16 %v1240
    %v1657 = vunpack.c.h.b16 %v1240
    %v1658 = vunpack.c.l.b16 %v1241
    %v1659 = vunpack.c.h.b16 %v1241
    %v1660 = vunpack.c.l.b16 %v1242
    %v1661 = vunpack.c.h.b16 %v1242
    %v1662 = vunpack.c.l.b16 %v1243
    %v1663 = vunpack.c.h.b16 %v1243
    %v1664 = vunpack.c.l.b16 %v1244
    %v1665 = vunpack.c.h.b16 %v1244
    %v1666 = vunpack.c.l.b16 %v1245
    %v1667 = vunpack.c.h.b16 %v1245
    %v1668 = vunpack.c.l.b16 %v1246
    %v1669 = vunpack.c.h.b16 %v1246
    %v1670 = vunpack.c.l.b16 %v1247
    %v1671 = vunpack.c.h.b16 %v1247
    %v1672 = vunpack.c.l.b16 %v1248
    %v1673 = vunpack.c.h.b16 %v1248
    %v1674 = vunpack.c.l.b16 %v1249
    %v1675 = vunpack.c.h.b16 %v1249
    %v1676 = vunpack.c.l.b16 %v1250
    %v1677 = vunpack.c.h.b16 %v1250
    %v1678 = vunpack.c.l.b16 %v1251
    %v1679 = vunpack.c.h.b16 %v1251
    %v1680 = vunpack.c.l.b16 %v1252
    %v1681 = vunpack.c.h.b16 %v1252
    %v1682 = vunpack.c.l.b16 %v1253
    %v1683 = vunpack.c.h.b16 %v1253
    %v1684 = vunpack.c.l.b16 %v1254
    %v1685 = vunpack.c.h.b16 %v1254
    %v1686 = vunpack.c.l.b16 %v1255
    %v1687 = vunpack.c.h.b16 %v1255
    %v1688 = vunpack.c.l.b16 %v1256
    %v1689 = vunpack.c.h.b16 %v1256
    %v1690 = vunpack.c.l.b16 %v1257
    %v1691 = vunpack.c.h.b16 %v1257
    %v1692 = vunpack.c.l.b16 %v1258
    %v1693 = vunpack.c.h.b16 %v1258
    %v1694 = vunpack.c.l.b16 %v1259
    %v1695 = vunpack.c.h.b16 %v1259
    %v1696 = vunpack.c.l.b16 %v1260
    %v1697 = vunpack.c.h.b16 %v1260
    %v1698 = vunpack.c.l.b16 %v1261
    %v1699 = vunpack.c.h.b16 %v1261
    %v1700 = vunpack.c.l.b16 %v1262
    %v1701 = vunpack.c.h.b16 %v1262
    %v1702 = vunpack.c.l.b16 %v1263
    %v1703 = vunpack.c.h.b16 %v1263
    %v1704 = vunpack.c.l.b16 %v1264
    %v1705 = vunpack.c.h.b16 %v1264
    %v1706 = vunpack.c.l.b16 %v1265
    %v1707 = vunpack.c.h.b16 %v1265
    %v1708 = vunpack.c.l.b16 %v1266
    %v1709 = vunpack.c.h.b16 %v1266
    %v1710 = vunpack.c.l.b16 %v1267
    %v1711 = vunpack.c.h.b16 %v1267
    %v1712 = vunpack.c.l.b16 %v1268
    %v1713 = vunpack.c.h.b16 %v1268
    %v1714 = vunpack.c.l.b16 %v1269
    %v1715 = vunpack.c.h.b16 %v1269
    %v1716 = vunpack.c.l.b16 %v1270
    %v1717 = vunpack.c.h.b16 %v1270
    %v1718 = vunpack.c.l.b16 %v1271
    %v1719 = vunpack.c.h.b16 %v1271
    %v1720 = vunpack.c.l.b16 %v1272
    %v1721 = vunpack.c.h.b16 %v1272
    %v1722 = vunpack.c.l.b16 %v1273
    %v1723 = vunpack.c.h.b16 %v1273
    %v1724 = vunpack.c.l.b16 %v1274
    %v1725 = vunpack.c.h.b16 %v1274
    %v1726 = vunpack.c.l.b16 %v1275
    %v1727 = vunpack.c.h.b16 %v1275
    %v1728 = vunpack.c.l.b16 %v1276
    %v1729 = vunpack.c.h.b16 %v1276
    %v1730 = vunpack.c.l.b16 %v1277
    %v1731 = vunpack.c.h.b16 %v1277
    %v1732 = vunpack.c.l.b16 %v1278
    %v1733 = vunpack.c.h.b16 %v1278
    %v1734 = vunpack.c.l.b16 %v1279
    %v1735 = vunpack.c.h.b16 %v1279
    %v1736 = vunpack.c.l.b16 %v1280
    %v1737 = vunpack.c.h.b16 %v1280
    %v1738 = vunpack.c.l.b16 %v1281
    %v1739 = vunpack.c.h.b16 %v1281
    %v1740 = vunpack.c.l.b16 %v1282
    %v1741 = vunpack.c.h.b16 %v1282
    %v1742 = vunpack.c.l.b16 %v1283
    %v1743 = vunpack.c.h.b16 %v1283
    %v1744 = vunpack.c.l.b16 %v1284
    %v1745 = vunpack.c.h.b16 %v1284
    %v1746 = vunpack.c.l.b16 %v1285
    %v1747 = vunpack.c.h.b16 %v1285
    %v1748 = vunpack.c.l.b16 %v1286
    %v1749 = vunpack.c.h.b16 %v1286
    %v1750 = vunpack.c.l.b16 %v1287
    %v1751 = vunpack.c.h.b16 %v1287
    %v1752 = vunpack.c.l.b16 %v1288
    %v1753 = vunpack.c.h.b16 %v1288
    %v1754 = vunpack.c.l.b16 %v1289
    %v1755 = vunpack.c.h.b16 %v1289
    %v1756 = vunpack.c.l.b16 %v1290
    %v1757 = vunpack.c.h.b16 %v1290
    %v1758 = vunpack.c.l.b16 %v1291
    %v1759 = vunpack.c.h.b16 %v1291
    %v1760 = vunpack.c.l.b16 %v1292
    %v1761 = vunpack.c.h.b16 %v1292
    %v1762 = vunpack.c.l.b16 %v1293
    %v1763 = vunpack.c.h.b16 %v1293
    %v1764 = vunpack.c.l.b16 %v1294
    %v1765 = vunpack.c.h.b16 %v1294
    %v1766 = vunpack.c.l.b16 %v1295
    %v1767 = vunpack.c.h.b16 %v1295
    %v1768 = vunpack.c.l.b16 %v1296
    %v1769 = vunpack.c.h.b16 %v1296
    %v1770 = vunpack.c.l.b16 %v1297
    %v1771 = vunpack.c.h.b16 %v1297
    %v1772 = vunpack.c.l.b16 %v1298
    %v1773 = vunpack.c.h.b16 %v1298
    %v1774 = vunpack.c.l.b16 %v1299
    %v1775 = vunpack.c.h.b16 %v1299
    %v1776 = vunpack.c.l.b16 %v1300
    %v1777 = vunpack.c.h.b16 %v1300
    %v1778 = vunpack.c.l.b16 %v1301
    %v1779 = vunpack.c.h.b16 %v1301
    %v1780 = vunpack.c.l.b16 %v1302
    %v1781 = vunpack.c.h.b16 %v1302
    %v1782 = vunpack.c.l.b16 %v1303
    %v1783 = vunpack.c.h.b16 %v1303
    %v1784 = vunpack.c.l.b16 %v1304
    %v1785 = vunpack.c.h.b16 %v1304
    %v1786 = vunpack.c.l.b16 %v1305
    %v1787 = vunpack.c.h.b16 %v1305
    %v1788 = vunpack.c.l.b16 %v1306
    %v1789 = vunpack.c.h.b16 %v1306
    %v1790 = vunpack.c.l.b16 %v1307
    %v1791 = vunpack.c.h.b16 %v1307
    %v1792 = vunpack.c.l.b16 %v1308
    %v1793 = vunpack.c.h.b16 %v1308
    %v1794 = vunpack.c.l.b16 %v1309
    %v1795 = vunpack.c.h.b16 %v1309
    %v1796 = vunpack.c.l.b16 %v1310
    %v1797 = vunpack.c.h.b16 %v1310
    %v1798 = vunpack.c.l.b16 %v1311
    %v1799 = vunpack.c.h.b16 %v1311
    %v1800 = vunpack.c.l.b16 %v1312
    %v1801 = vunpack.c.h.b16 %v1312
    %v1802 = vunpack.c.l.b16 %v1313
    %v1803 = vunpack.c.h.b16 %v1313
    %v1804 = vunpack.c.l.b16 %v1314
    %v1805 = vunpack.c.h.b16 %v1314
    %v1806 = vunpack.c.l.b16 %v1315
    %v1807 = vunpack.c.h.b16 %v1315
    %v1808 = vunpack.c.l.b16 %v1316
    %v1809 = vunpack.c.h.b16 %v1316
    %v1810 = vunpack.c.l.b16 %v1317
    %v1811 = vunpack.c.h.b16 %v1317
    %v1812 = vunpack.c.l.b16 %v1318
    %v1813 = vunpack.c.h.b16 %v1318
    %v1814 = vunpack.c.l.b16 %v1319
    %v1815 = vunpack.c.h.b16 %v1319
    %v1816 = vunpack.c.l.b16 %v1320
    %v1817 = vunpack.c.h.b16 %v1320
    %v1818 = vunpack.c.l.b16 %v1321
    %v1819 = vunpack.c.h.b16 %v1321
    %v1820 = vunpack.c.l.b16 %v1322
    %v1821 = vunpack.c.h.b16 %v1322
    %v1822 = vunpack.c.l.b16 %v1323
    %v1823 = vunpack.c.h.b16 %v1323
    %v1824 = vunpack.c.l.b16 %v1324
    %v1825 = vunpack.c.h.b16 %v1324
    %v1826 = vunpack.c.l.b16 %v1325
    %v1827 = vunpack.c.h.b16 %v1325
    %v1828 = vunpack.c.l.b16 %v1326
    %v1829 = vunpack.c.h.b16 %v1326
    %v1830 = vunpack.c.l.b16 %v1327
    %v1831 = vunpack.c.h.b16 %v1327
    %v1832 = vunpack.c.l.b16 %v1328
    %v1833 = vunpack.c.h.b16 %v1328
    %v1834 = vunpack.c.l.b16 %v1329
    %v1835 = vunpack.c.h.b16 %v1329
    %v1836 = vunpack.c.l.b16 %v1330
    %v1837 = vunpack.c.h.b16 %v1330
    %v1838 = vunpack.c.l.b16 %v1331
    %v1839 = vunpack.c.h.b16 %v1331
    %v1840 = vunpack.c.l.b16 %v1332
    %v1841 = vunpack.c.h.b16 %v1332
    %v1842 = vunpack.c.l.b16 %v1333
    %v1843 = vunpack.c.h.b16 %v1333
    %v1844 = vunpack.c.l.b16 %v1334
    %v1845 = vunpack.c.h.b16 %v1334
    %v1846 = vunpack.c.l.b16 %v1335
    %v1847 = vunpack.c.h.b16 %v1335
    %v1848 = vunpack.c.l.b16 %v1336
    %v1849 = vunpack.c.h.b16 %v1336
    %v1850 = vunpack.c.l.b16 %v1337
    %v1851 = vunpack.c.h.b16 %v1337
    %v1852 = vunpack.c.l.b16 %v1338
    %v1853 = vunpack.c.h.b16 %v1338
    %v1854 = vunpack.c.l.b16 %v1339
    %v1855 = vunpack.c.h.b16 %v1339
    %v1856 = vunpack.c.l.b16 %v1340
    %v1857 = vunpack.c.h.b16 %v1340
    %v1858 = vunpack.c.l.b16 %v1341
    %v1859 = vunpack.c.h.b16 %v1341
    %v1860 = vunpack.c.l.b16 %v1342
    %v1861 = vunpack.c.h.b16 %v1342
    %v1862 = vunpack.c.l.b16 %v1343
    %v1863 = vunpack.c.h.b16 %v1343
    %v1864 = vunpack.c.l.b16 %v1344
    %v1865 = vunpack.c.h.b16 %v1344
    %v1866 = vunpack.c.l.b16 %v1345
    %v1867 = vunpack.c.h.b16 %v1345
    %v1868 = vunpack.c.l.b16 %v1346
    %v1869 = vunpack.c.h.b16 %v1346
    %v1870 = vunpack.c.l.b16 %v1347
    %v1871 = vunpack.c.h.b16 %v1347
    %v1872 = vunpack.c.l.b16 %v1348
    %v1873 = vunpack.c.h.b16 %v1348
    %v1874 = vunpack.c.l.b16 %v1349
    %v1875 = vunpack.c.h.b16 %v1349
    %v1876 = vunpack.c.l.b16 %v1350
    %v1877 = vunpack.c.h.b16 %v1350
    %v1878 = vunpack.c.l.b16 %v1351
    %v1879 = vunpack.c.h.b16 %v1351
    %v1880 = vunpack.c.l.b16 %v1352
    %v1881 = vunpack.c.h.b16 %v1352
    %v1882 = vunpack.c.l.b16 %v1353
    %v1883 = vunpack.c.h.b16 %v1353
    %v1884 = vunpack.c.l.b16 %v1354
    %v1885 = vunpack.c.h.b16 %v1354
    %v1886 = vunpack.c.l.b16 %v1355
    %v1887 = vunpack.c.h.b16 %v1355
    %v1888 = vunpack.c.l.b16 %v1356
    %v1889 = vunpack.c.h.b16 %v1356
    %v1890 = vunpack.c.l.b16 %v1357
    %v1891 = vunpack.c.h.b16 %v1357
    %v1892 = vunpack.c.l.b16 %v1358
    %v1893 = vunpack.c.h.b16 %v1358
    %v1894 = vunpack.c.l.b16 %v1359
    %v1895 = vunpack.c.h.b16 %v1359
    %v1896 = vunpack.c.l.b16 %v1360
    %v1897 = vunpack.c.h.b16 %v1360
    %v1898 = vunpack.c.l.b16 %v1361
    %v1899 = vunpack.c.h.b16 %v1361
    %v1900 = vunpack.c.l.b16 %v1362
    %v1901 = vunpack.c.h.b16 %v1362
    %v1902 = vunpack.c.l.b16 %v1363
    %v1903 = vunpack.c.h.b16 %v1363
    %v1904 = vunpack.c.l.b16 %v1364
    %v1905 = vunpack.c.h.b16 %v1364
    %v1906 = vunpack.c.l.b16 %v1365
    %v1907 = vunpack.c.h.b16 %v1365
    %v1908 = vunpack.c.l.b16 %v1366
    %v1909 = vunpack.c.h.b16 %v1366
    %v1910 = vunpack.c.l.b16 %v1367
    %v1911 = vunpack.c.h.b16 %v1367
    %v1912 = vunpack.c.l.b16 %v1368
    %v1913 = vunpack.c.h.b16 %v1368
    %v1914 = vunpack.c.l.b16 %v1369
    %v1915 = vunpack.c.h.b16 %v1369
    %v1916 = vunpack.c.l.b16 %v1370
    %v1917 = vunpack.c.h.b16 %v1370
    %v1918 = vunpack.c.l.b16 %v1371
    %v1919 = vunpack.c.h.b16 %v1371
    %v1920 = vunpack.c.l.b16 %v1372
    %v1921 = vunpack.c.h.b16 %v1372
    %v1922 = vunpack.c.l.b16 %v1373
    %v1923 = vunpack.c.h.b16 %v1373
    %v1924 = vunpack.c.l.b16 %v1374
    %v1925 = vunpack.c.h.b16 %v1374
    %v1926 = vunpack.c.l.b16 %v1375
    %v1927 = vunpack.c.h.b16 %v1375
    %v1928 = vunpack.c.l.b16 %v1376
    %v1929 = vunpack.c.h.b16 %v1376
    %v1930 = vunpack.c.l.b16 %v1377
    %v1931 = vunpack.c.h.b16 %v1377
    %v1932 = vunpack.c.l.b16 %v1378
    %v1933 = vunpack.c.h.b16 %v1378
    %v1934 = vunpack.c.l.b16 %v1379
    %v1935 = vunpack.c.h.b16 %v1379
    %v1936 = vunpack.c.l.b16 %v1380
    %v1937 = vunpack.c.h.b16 %v1380
    %v1938 = vunpack.c.l.b16 %v1381
    %v1939 = vunpack.c.h.b16 %v1381
    %v1940 = vunpack.c.l.b16 %v1382
    %v1941 = vunpack.c.h.b16 %v1382
    %v1942 = vunpack.c.l.b16 %v1383
    %v1943 = vunpack.c.h.b16 %v1383
    %v1944 = vunpack.c.l.b16 %v1384
    %v1945 = vunpack.c.h.b16 %v1384
    %v1946 = vunpack.c.l.b16 %v1385
    %v1947 = vunpack.c.h.b16 %v1385
    %v1948 = vunpack.c.l.b16 %v1386
    %v1949 = vunpack.c.h.b16 %v1386
    %v1950 = vunpack.c.l.b16 %v1387
    %v1951 = vunpack.c.h.b16 %v1387
    %v1952 = vunpack.c.l.b16 %v1388
    %v1953 = vunpack.c.h.b16 %v1388
    %v1954 = vunpack.c.l.b16 %v1389
    %v1955 = vunpack.c.h.b16 %v1389
    %v1956 = vunpack.c.l.b16 %v1390
    %v1957 = vunpack.c.h.b16 %v1390
    %v1958 = vunpack.c.l.b16 %v1391
    %v1959 = vunpack.c.h.b16 %v1391
    %v1960 = vunpack.c.l.b16 %v1392
    %v1961 = vunpack.c.h.b16 %v1392
    %v1962 = vunpack.c.l.b16 %v1393
    %v1963 = vunpack.c.h.b16 %v1393
    %v1964 = vunpack.c.l.b16 %v1394
    %v1965 = vunpack.c.h.b16 %v1394
    %v1966 = vunpack.c.l.b16 %v1395
    %v1967 = vunpack.c.h.b16 %v1395
    %v1968 = vunpack.c.l.b16 %v1396
    %v1969 = vunpack.c.h.b16 %v1396
    %v1970 = vunpack.c.l.b16 %v1397
    %v1971 = vunpack.c.h.b16 %v1397
    %v1972 = vunpack.c.l.b16 %v1398
    %v1973 = vunpack.c.h.b16 %v1398
    %v1974 = vunpack.c.l.b16 %v1399
    %v1975 = vunpack.c.h.b16 %v1399
    %v1976 = vunpack.c.l.b16 %v1400
    %v1977 = vunpack.c.h.b16 %v1400
    %v1978 = vunpack.c.l.b16 %v1401
    %v1979 = vunpack.c.h.b16 %v1401
    %v1980 = vunpack.c.l.b16 %v1402
    %v1981 = vunpack.c.h.b16 %v1402
    %v1982 = vunpack.c.l.b16 %v1403
    %v1983 = vunpack.c.h.b16 %v1403
    %v1984 = vunpack.c.l.b16 %v1404
    %v1985 = vunpack.c.h.b16 %v1404
    %v1986 = vunpack.c.l.b16 %v1405
    %v1987 = vunpack.c.h.b16 %v1405
    %v1988 = vunpack.c.l.b16 %v1406
    %v1989 = vunpack.c.h.b16 %v1406
    %v1990 = vunpack.c.l.b16 %v1407
    %v1991 = vunpack.c.h.b16 %v1407
    %v1992 = vunpack.c.l.b16 %v1408
    %v1993 = vunpack.c.h.b16 %v1408
    %v1994 = vunpack.c.l.b16 %v1409
    %v1995 = vunpack.c.h.b16 %v1409
    %v1996 = vunpack.c.l.b16 %v1410
    %v1997 = vunpack.c.h.b16 %v1410
    %v1998 = vunpack.c.l.b16 %v1411
    %v1999 = vunpack.c.h.b16 %v1411
    %v2000 = vunpack.c.l.b16 %v1412
    %v2001 = vunpack.c.h.b16 %v1412
    %v2002 = vunpack.c.l.b16 %v1413
    %v2003 = vunpack.c.h.b16 %v1413
    %v2004 = vunpack.c.l.b16 %v1414
    %v2005 = vunpack.c.h.b16 %v1414
    %v2006 = vunpack.c.l.b16 %v1415
    %v2007 = vunpack.c.h.b16 %v1415
    %v2008 = vunpack.c.l.b16 %v1416
    %v2009 = vunpack.c.h.b16 %v1416
    %v2010 = vunpack.c.l.b16 %v1417
    %v2011 = vunpack.c.h.b16 %v1417
    %v2012 = vunpack.c.l.b16 %v1418
    %v2013 = vunpack.c.h.b16 %v1418
    %v2014 = vunpack.c.l.b16 %v1419
    %v2015 = vunpack.c.h.b16 %v1419
    %v2016 = vunpack.c.l.b16 %v1420
    %v2017 = vunpack.c.h.b16 %v1420
    %v2018 = vunpack.c.l.b16 %v1421
    %v2019 = vunpack.c.h.b16 %v1421
    %v2020 = vpack.c.b16 %v1640, %v1636
    %v2021 = vpack.c.b16 %v1641, %v1637
    %v2022 = vpack.c.b16 %v1642, %v1638
    %v2023 = vpack.c.b16 %v1643, %v1639
    %v2024 = vpack.c.b16 %v1648, %v1644
    %v2025 = vpack.c.b16 %v1649, %v1645
    %v2026 = vpack.c.b16 %v1650, %v1646
    %v2027 = vpack.c.b16 %v1651, %v1647
    %v2028 = vpack.c.b16 %v1656, %v1652
    %v2029 = vpack.c.b16 %v1657, %v1653
    %v2030 = vpack.c.b16 %v1658, %v1654
    %v2031 = vpack.c.b16 %v1659, %v1655
    %v2032 = vpack.c.b16 %v1664, %v1660
    %v2033 = vpack.c.b16 %v1665, %v1661
    %v2034 = vpack.c.b16 %v1666, %v1662
    %v2035 = vpack.c.b16 %v1667, %v1663
    %v2036 = vpack.c.b16 %v1672, %v1668
    %v2037 = vpack.c.b16 %v1673, %v1669
    %v2038 = vpack.c.b16 %v1674, %v1670
    %v2039 = vpack.c.b16 %v1675, %v1671
    %v2040 = vpack.c.b16 %v1680, %v1676
    %v2041 = vpack.c.b16 %v1681, %v1677
    %v2042 = vpack.c.b16 %v1682, %v1678
    %v2043 = vpack.c.b16 %v1683, %v1679
    %v2044 = vpack.c.b16 %v1688, %v1684
    %v2045 = vpack.c.b16 %v1689, %v1685
    %v2046 = vpack.c.b16 %v1690, %v1686
    %v2047 = vpack.c.b16 %v1691, %v1687
    %v2048 = vpack.c.b16 %v1696, %v1692
    %v2049 = vpack.c.b16 %v1697, %v1693
    %v2050 = vpack.c.b16 %v1698, %v1694
    %v2051 = vpack.c.b16 %v1699, %v1695
    %v2052 = vpack.c.b16 %v1704, %v1700
    %v2053 = vpack.c.b16 %v1705, %v1701
    %v2054 = vpack.c.b16 %v1706, %v1702
    %v2055 = vpack.c.b16 %v1707, %v1703
    %v2056 = vpack.c.b16 %v1712, %v1708
    %v2057 = vpack.c.b16 %v1713, %v1709
    %v2058 = vpack.c.b16 %v1714, %v1710
    %v2059 = vpack.c.b16 %v1715, %v1711
    %v2060 = vpack.c.b16 %v1720, %v1716
    %v2061 = vpack.c.b16 %v1721, %v1717
    %v2062 = vpack.c.b16 %v1722, %v1718
    %v2063 = vpack.c.b16 %v1723, %v1719
    %v2064 = vpack.c.b16 %v1728, %v1724
    %v2065 = vpack.c.b16 %v1729, %v1725
    %v2066 = vpack.c.b16 %v1730, %v1726
    %v2067 = vpack.c.b16 %v1731, %v1727
    %v2068 = vpack.c.b16 %v1736, %v1732
    %v2069 = vpack.c.b16 %v1737, %v1733
    %v2070 = vpack.c.b16 %v1738, %v1734
    %v2071 = vpack.c.b16 %v1739, %v1735
    %v2072 = vpack.c.b16 %v1744, %v1740
    %v2073 = vpack.c.b16 %v1745, %v1741
    %v2074 = vpack.c.b16 %v1746, %v1742
    %v2075 = vpack.c.b16 %v1747, %v1743
    %v2076 = vpack.c.b16 %v1752, %v1748
    %v2077 = vpack.c.b16 %v1753, %v1749
    %v2078 = vpack.c.b16 %v1754, %v1750
    %v2079 = vpack.c.b16 %v1755, %v1751
    %v2080 = vpack.c.b16 %v1760, %v1756
    %v2081 = vpack.c.b16 %v1761, %v1757
    %v2082 = vpack.c.b16 %v1762, %v1758
    %v2083 = vpack.c.b16 %v1763, %v1759
    %v2084 = vpack.c.b16 %v1768, %v1764
    %v2085 = vpack.c.b16 %v1769, %v1765
    %v2086 = vpack.c.b16 %v1770, %v1766
    %v2087 = vpack.c.b16 %v1771, %v1767
    %v2088 = vpack.c.b16 %v1776, %v1772
    %v2089 = vpack.c.b16 %v1777, %v1773
    %v2090 = vpack.c.b16 %v1778, %v1774
    %v2091 = vpack.c.b16 %v1779, %v1775
    %v2092 = vpack.c.b16 %v1784, %v1780
    %v2093 = vpack.c.b16 %v1785, %v1781
    %v2094 = vpack.c.b16 %v1786, %v1782
    %v2095 = vpack.c.b16 %v1787, %v1783
    %v2096 = vpack.c.b16 %v1792, %v1788
    %v2097 = vpack.c.b16 %v1793, %v1789
    %v2098 = vpack.c.b16 %v1794, %v1790
    %v2099 = vpack.c.b16 %v1795, %v1791
    %v2100 = vpack.c.b16 %v1800, %v1796
    %v2101 = vpack.c.b16 %v1801, %v1797
    %v2102 = vpack.c.b16 %v1802, %v1798
    %v2103 = vpack.c.b16 %v1803, %v1799
    %v2104 = vpack.c.b16 %v1808, %v1804
    %v2105 = vpack.c.b16 %v1809, %v1805
    %v2106 = vpack.c.b16 %v1810, %v1806
    %v2107 = vpack.c.b16 %v1811, %v1807
    %v2108 = vpack.c.b16 %v1816, %v1812
    %v2109 = vpack.c.b16 %v1817, %v1813
    %v2110 = vpack.c.b16 %v1818, %v1814
    %v2111 = vpack.c.b16 %v1819, %v1815
    %v2112 = vpack.c.b16 %v1824, %v1820
    %v2113 = vpack.c.b16 %v1825, %v1821
    %v2114 = vpack.c.b16 %v1826, %v1822
    %v2115 = vpack.c.b16 %v1827, %v1823
    %v2116 = vpack.c.b16 %v1832, %v1828
    %v2117 = vpack.c.b16 %v1833, %v1829
    %v2118 = vpack.c.b16 %v1834, %v1830
    %v2119 = vpack.c.b16 %v1835, %v1831
    %v2120 = vpack.c.b16 %v1840, %v1836
    %v2121 = vpack.c.b16 %v1841, %v1837
    %v2122 = vpack.c.b16 %v1842, %v1838
    %v2123 = vpack.c.b16 %v1843, %v1839
    %v2124 = vpack.c.b16 %v1848, %v1844
    %v2125 = vpack.c.b16 %v1849, %v1845
    %v2126 = vpack.c.b16 %v1850, %v1846
    %v2127 = vpack.c.b16 %v1851, %v1847
    %v2128 = vpack.c.b16 %v1856, %v1852
    %v2129 = vpack.c.b16 %v1857, %v1853
    %v2130 = vpack.c.b16 %v1858, %v1854
    %v2131 = vpack.c.b16 %v1859, %v1855
    %v2132 = vpack.c.b16 %v1864, %v1860
    %v2133 = vpack.c.b16 %v1865, %v1861
    %v2134 = vpack.c.b16 %v1866, %v1862
    %v2135 = vpack.c.b16 %v1867, %v1863
    %v2136 = vpack.c.b16 %v1872, %v1868
    %v2137 = vpack.c.b16 %v1873, %v1869
    %v2138 = vpack.c.b16 %v1874, %v1870
    %v2139 = vpack.c.b16 %v1875, %v1871
    %v2140 = vpack.c.b16 %v1880, %v1876
    %v2141 = vpack.c.b16 %v1881, %v1877
    %v2142 = vpack.c.b16 %v1882, %v1878
    %v2143 = vpack.c.b16 %v1883, %v1879
    %v2144 = vpack.c.b16 %v1888, %v1884
    %v2145 = vpack.c.b16 %v1889, %v1885
    %v2146 = vpack.c.b16 %v1890, %v1886
    %v2147 = vpack.c.b16 %v1891, %v1887
    %v2148 = vpack.c.b16 %v1896, %v1892
    %v2149 = vpack.c.b16 %v1897, %v1893
    %v2150 = vpack.c.b16 %v1898, %v1894
    %v2151 = vpack.c.b16 %v1899, %v1895
    %v2152 = vpack.c.b16 %v1904, %v1900
    %v2153 = vpack.c.b16 %v1905, %v1901
    %v2154 = vpack.c.b16 %v1906, %v1902
    %v2155 = vpack.c.b16 %v1907, %v1903
    %v2156 = vpack.c.b16 %v1912, %v1908
    %v2157 = vpack.c.b16 %v1913, %v1909
    %v2158 = vpack.c.b16 %v1914, %v1910
    %v2159 = vpack.c.b16 %v1915, %v1911
    %v2160 = vpack.c.b16 %v1920, %v1916
    %v2161 = vpack.c.b16 %v1921, %v1917
    %v2162 = vpack.c.b16 %v1922, %v1918
    %v2163 = vpack.c.b16 %v1923, %v1919
    %v2164 = vpack.c.b16 %v1928, %v1924
    %v2165 = vpack.c.b16 %v1929, %v1925
    %v2166 = vpack.c.b16 %v1930, %v1926
    %v2167 = vpack.c.b16 %v1931, %v1927
    %v2168 = vpack.c.b16 %v1936, %v1932
    %v2169 = vpack.c.b16 %v1937, %v1933
    %v2170 = vpack.c.b16 %v1938, %v1934
    %v2171 = vpack.c.b16 %v1939, %v1935
    %v2172 = vpack.c.b16 %v1944, %v1940
    %v2173 = vpack.c.b16 %v1945, %v1941
    %v2174 = vpack.c.b16 %v1946, %v1942
    %v2175 = vpack.c.b16 %v1947, %v1943
    %v2176 = vpack.c.b16 %v1952, %v1948
    %v2177 = vpack.c.b16 %v1953, %v1949
    %v2178 = vpack.c.b16 %v1954, %v1950
    %v2179 = vpack.c.b16 %v1955, %v1951
    %v2180 = vpack.c.b16 %v1960, %v1956
    %v2181 = vpack.c.b16 %v1961, %v1957
    %v2182 = vpack.c.b16 %v1962, %v1958
    %v2183 = vpack.c.b16 %v1963, %v1959
    %v2184 = vpack.c.b16 %v1968, %v1964
    %v2185 = vpack.c.b16 %v1969, %v1965
    %v2186 = vpack.c.b16 %v1970, %v1966
    %v2187 = vpack.c.b16 %v1971, %v1967
    %v2188 = vpack.c.b16 %v1976, %v1972
    %v2189 = vpack.c.b16 %v1977, %v1973
    %v2190 = vpack.c.b16 %v1978, %v1974
    %v2191 = vpack.c.b16 %v1979, %v1975
    %v2192 = vpack.c.b16 %v1984, %v1980
    %v2193 = vpack.c.b16 %v1985, %v1981
    %v2194 = vpack.c.b16 %v1986, %v1982
    %v2195 = vpack.c.b16 %v1987, %v1983
    %v2196 = vpack.c.b16 %v1992, %v1988
    %v2197 = vpack.c.b16 %v1993, %v1989
    %v2198 = vpack.c.b16 %v1994, %v1990
    %v2199 = vpack.c.b16 %v1995, %v1991
    %v2200 = vpack.c.b16 %v2000, %v1996
    %v2201 = vpack.c.b16 %v2001, %v1997
    %v2202 = vpack.c.b16 %v2002, %v1998
    %v2203 = vpack.c.b16 %v2003, %v1999
    %v2204 = vpack.c.b16 %v2008, %v2004
    %v2205 = vpack.c.b16 %v2009, %v2005
    %v2206 = vpack.c.b16 %v2010, %v2006
    %v2207 = vpack.c.b16 %v2011, %v2007
    %v2208 = vpack.c.b16 %v2016, %v2012
    %v2209 = vpack.c.b16 %v2017, %v2013
    %v2210 = vpack.c.b16 %v2018, %v2014
    %v2211 = vpack.c.b16 %v2019, %v2015
    %2404 = vmatprep.subr.bf16.mxu0 %v2049
    %2405 = vmatpush1.bf16.msra.mxu0 %v2048
    %2406 = vmatprep.subr.bf16.mxu0 %v2045
    %2407 = vmatpush1.bf16.msra.mxu0 %v2044
    %2408 = vmatprep.subr.bf16.mxu0 %v2041
    %2409 = vmatpush1.bf16.msra.mxu0 %v2040
    %2410 = vmatprep.subr.bf16.mxu0 %v2037
    %2411 = vmatpush1.bf16.msra.mxu0 %v2036
    %2412 = vmatprep.subr.bf16.mxu0 %v2033
    %2413 = vmatpush1.bf16.msra.mxu0 %v2032
    %2414 = vmatprep.subr.bf16.mxu0 %v2029
    %2415 = vmatpush1.bf16.msra.mxu0 %v2028
    %2416 = vmatprep.subr.bf16.mxu0 %v2025
    %2417 = vmatpush1.bf16.msra.mxu0 %v2024
    %2418 = vmatprep.subr.bf16.mxu0 %v2021
    %2419 = vmatpush1.bf16.msra.mxu0 %v2020
    %2420 = vmatprep.subr.bf16.mxu0 %v2081
    %2421 = vmatpush2.bf16.msra.mxu0 %v2080
    %2422 = vmatprep.subr.bf16.mxu0 %v2077
    %2423 = vmatpush2.bf16.msra.mxu0 %v2076
    %2424 = vmatprep.subr.bf16.mxu0 %v2073
    %2425 = vmatpush2.bf16.msra.mxu0 %v2072
    %2426 = vmatprep.subr.bf16.mxu0 %v2069
    %2427 = vmatpush2.bf16.msra.mxu0 %v2068
    %2428 = vmatprep.subr.bf16.mxu0 %v2065
    %2429 = vmatpush2.bf16.msra.mxu0 %v2064
    %2430 = vmatprep.subr.bf16.mxu0 %v2061
    %2431 = vmatpush2.bf16.msra.mxu0 %v2060
    %2432 = vmatprep.subr.bf16.mxu0 %v2057
    %2433 = vmatpush2.bf16.msra.mxu0 %v2056
    %2434 = vmatprep.subr.bf16.mxu0 %v2053
    %2435 = vmatpush2.bf16.msra.mxu0 %v2052
    %2436 = vmatprep.mubr.bf16.mxu0 %v1225
    %2437 = vmatmul.mubr.bf16.gmra.mxu0 %v1224
    %v2438 = vpop.f32.mrf.mxu0
    %v2439 = vadd.f32 %v1427, %v2438
    %v2440 = vpop.f32.mrf.mxu0
    %v2441 = vadd.f32 %v1431, %v2440
    %v2442 = vpop.f32.mrf.mxu0
    %v2443 = vadd.f32 %v1427, %v2442
    %v2444 = vpop.f32.mrf.mxu0
    %v2445 = vadd.f32 %v1431, %v2444
    %2446 = vdwg.mxu0
    %2447 = vmatprep.subr.bf16.mxu0 %v2113
    %2448 = vmatpush1.bf16.msra.mxu0 %v2112
    %2449 = vmatprep.subr.bf16.mxu0 %v2109
    %2450 = vmatpush1.bf16.msra.mxu0 %v2108
    %2451 = vmatprep.subr.bf16.mxu0 %v2105
    %2452 = vmatpush1.bf16.msra.mxu0 %v2104
    %2453 = vmatprep.subr.bf16.mxu0 %v2101
    %2454 = vmatpush1.bf16.msra.mxu0 %v2100
    %2455 = vmatprep.subr.bf16.mxu0 %v2097
    %2456 = vmatpush1.bf16.msra.mxu0 %v2096
    %2457 = vmatprep.subr.bf16.mxu0 %v2093
    %2458 = vmatpush1.bf16.msra.mxu0 %v2092
    %2459 = vmatprep.subr.bf16.mxu0 %v2089
    %2460 = vmatpush1.bf16.msra.mxu0 %v2088
    %2461 = vmatprep.subr.bf16.mxu0 %v2085
    %2462 = vmatpush1.bf16.msra.mxu0 %v2084
    %2463 = vmatprep.subr.bf16.mxu0 %v2145
    %2464 = vmatpush2.bf16.msra.mxu0 %v2144
    %2465 = vmatprep.subr.bf16.mxu0 %v2141
    %2466 = vmatpush2.bf16.msra.mxu0 %v2140
    %2467 = vmatprep.subr.bf16.mxu0 %v2137
    %2468 = vmatpush2.bf16.msra.mxu0 %v2136
    %2469 = vmatprep.subr.bf16.mxu0 %v2133
    %2470 = vmatpush2.bf16.msra.mxu0 %v2132
    %2471 = vmatprep.subr.bf16.mxu0 %v2129
    %2472 = vmatpush2.bf16.msra.mxu0 %v2128
    %2473 = vmatprep.subr.bf16.mxu0 %v2125
    %2474 = vmatpush2.bf16.msra.mxu0 %v2124
    %2475 = vmatprep.subr.bf16.mxu0 %v2121
    %2476 = vmatpush2.bf16.msra.mxu0 %v2120
    %2477 = vmatprep.subr.bf16.mxu0 %v2117
    %2478 = vmatpush2.bf16.msra.mxu0 %v2116
    %2479 = vmatprep.mubr.bf16.mxu0 %v1227
    %2480 = vmatmul.mubr.bf16.gmra.mxu0 %v1226
    %v2481 = vpop.f32.mrf.mxu0
    %v2482 = vadd.f32 %v2439, %v2481
    %v2483 = vpop.f32.mrf.mxu0
    %v2484 = vadd.f32 %v2441, %v2483
    %v2485 = vpop.f32.mrf.mxu0
    %v2486 = vadd.f32 %v2443, %v2485
    %v2487 = vpop.f32.mrf.mxu0
    %v2488 = vadd.f32 %v2445, %v2487
    %2489 = vdwg.mxu0
    %2490 = vmatprep.subr.bf16.mxu0 %v2177
    %2491 = vmatpush1.bf16.msra.mxu0 %v2176
    %2492 = vmatprep.subr.bf16.mxu0 %v2173
    %2493 = vmatpush1.bf16.msra.mxu0 %v2172
    %2494 = vmatprep.subr.bf16.mxu0 %v2169
    %2495 = vmatpush1.bf16.msra.mxu0 %v2168
    %2496 = vmatprep.subr.bf16.mxu0 %v2165
    %2497 = vmatpush1.bf16.msra.mxu0 %v2164
    %2498 = vmatprep.subr.bf16.mxu0 %v2161
    %2499 = vmatpush1.bf16.msra.mxu0 %v2160
    %2500 = vmatprep.subr.bf16.mxu0 %v2157
    %2501 = vmatpush1.bf16.msra.mxu0 %v2156
    %2502 = vmatprep.subr.bf16.mxu0 %v2153
    %2503 = vmatpush1.bf16.msra.mxu0 %v2152
    %2504 = vmatprep.subr.bf16.mxu0 %v2149
    %2505 = vmatpush1.bf16.msra.mxu0 %v2148
    %2506 = vmatprep.subr.bf16.mxu0 %v2209
    %2507 = vmatpush2.bf16.msra.mxu0 %v2208
    %2508 = vmatprep.subr.bf16.mxu0 %v2205
    %2509 = vmatpush2.bf16.msra.mxu0 %v2204
    %2510 = vmatprep.subr.bf16.mxu0 %v2201
    %2511 = vmatpush2.bf16.msra.mxu0 %v2200
    %2512 = vmatprep.subr.bf16.mxu0 %v2197
    %2513 = vmatpush2.bf16.msra.mxu0 %v2196
    %2514 = vmatprep.subr.bf16.mxu0 %v2193
    %2515 = vmatpush2.bf16.msra.mxu0 %v2192
    %2516 = vmatprep.subr.bf16.mxu0 %v2189
    %2517 = vmatpush2.bf16.msra.mxu0 %v2188
    %2518 = vmatprep.subr.bf16.mxu0 %v2185
    %2519 = vmatpush2.bf16.msra.mxu0 %v2184
    %2520 = vmatprep.subr.bf16.mxu0 %v2181
    %2521 = vmatpush2.bf16.msra.mxu0 %v2180
    %2522 = vmatprep.mubr.bf16.mxu0 %v1229
    %2523 = vmatmul.mubr.bf16.gmra.mxu0 %v1228
    %v2524 = vpop.f32.mrf.mxu0
    %v2525 = vadd.f32 %v2482, %v2524
    %v2526 = vpop.f32.mrf.mxu0
    %v2527 = vadd.f32 %v2484, %v2526
    %v2528 = vpop.f32.mrf.mxu0
    %v2529 = vadd.f32 %v2486, %v2528
    %v2530 = vpop.f32.mrf.mxu0
    %v2531 = vadd.f32 %v2488, %v2530
    %2532 = vdwg.mxu0
    %2533 = vmatprep.subr.bf16.mxu0 %v2051
    %2534 = vmatpush1.bf16.msra.mxu0 %v2050
    %2535 = vmatprep.subr.bf16.mxu0 %v2047
    %2536 = vmatpush1.bf16.msra.mxu0 %v2046
    %2537 = vmatprep.subr.bf16.mxu0 %v2043
    %2538 = vmatpush1.bf16.msra.mxu0 %v2042
    %2539 = vmatprep.subr.bf16.mxu0 %v2039
    %2540 = vmatpush1.bf16.msra.mxu0 %v2038
    %2541 = vmatprep.subr.bf16.mxu0 %v2035
    %2542 = vmatpush1.bf16.msra.mxu0 %v2034
    %2543 = vmatprep.subr.bf16.mxu0 %v2031
    %2544 = vmatpush1.bf16.msra.mxu0 %v2030
    %2545 = vmatprep.subr.bf16.mxu0 %v2027
    %2546 = vmatpush1.bf16.msra.mxu0 %v2026
    %2547 = vmatprep.subr.bf16.mxu0 %v2023
    %2548 = vmatpush1.bf16.msra.mxu0 %v2022
    %2549 = vmatprep.subr.bf16.mxu0 %v2083
    %2550 = vmatpush2.bf16.msra.mxu0 %v2082
    %2551 = vmatprep.subr.bf16.mxu0 %v2079
    %2552 = vmatpush2.bf16.msra.mxu0 %v2078
    %2553 = vmatprep.subr.bf16.mxu0 %v2075
    %2554 = vmatpush2.bf16.msra.mxu0 %v2074
    %2555 = vmatprep.subr.bf16.mxu0 %v2071
    %2556 = vmatpush2.bf16.msra.mxu0 %v2070
    %2557 = vmatprep.subr.bf16.mxu0 %v2067
    %2558 = vmatpush2.bf16.msra.mxu0 %v2066
    %2559 = vmatprep.subr.bf16.mxu0 %v2063
    %2560 = vmatpush2.bf16.msra.mxu0 %v2062
    %2561 = vmatprep.subr.bf16.mxu0 %v2059
    %2562 = vmatpush2.bf16.msra.mxu0 %v2058
    %2563 = vmatprep.subr.bf16.mxu0 %v2055
    %2564 = vmatpush2.bf16.msra.mxu0 %v2054
    %2565 = vmatprep.mubr.bf16.mxu0 %v1225
    %2566 = vmatmul.mubr.bf16.gmra.mxu0 %v1224
    %v2567 = vpop.f32.mrf.mxu0
    %v2568 = vadd.f32 %v1435, %v2567
    %v2569 = vpop.f32.mrf.mxu0
    %v2570 = vadd.f32 %v1439, %v2569
    %v2571 = vpop.f32.mrf.mxu0
    %v2572 = vadd.f32 %v1435, %v2571
    %v2573 = vpop.f32.mrf.mxu0
    %v2574 = vadd.f32 %v1439, %v2573
    %2575 = vdwg.mxu0
    %2576 = vmatprep.subr.bf16.mxu0 %v2115
    %2577 = vmatpush1.bf16.msra.mxu0 %v2114
    %2578 = vmatprep.subr.bf16.mxu0 %v2111
    %2579 = vmatpush1.bf16.msra.mxu0 %v2110
    %2580 = vmatprep.subr.bf16.mxu0 %v2107
    %2581 = vmatpush1.bf16.msra.mxu0 %v2106
    %2582 = vmatprep.subr.bf16.mxu0 %v2103
    %2583 = vmatpush1.bf16.msra.mxu0 %v2102
    %2584 = vmatprep.subr.bf16.mxu0 %v2099
    %2585 = vmatpush1.bf16.msra.mxu0 %v2098
    %2586 = vmatprep.subr.bf16.mxu0 %v2095
    %2587 = vmatpush1.bf16.msra.mxu0 %v2094
    %2588 = vmatprep.subr.bf16.mxu0 %v2091
    %2589 = vmatpush1.bf16.msra.mxu0 %v2090
    %2590 = vmatprep.subr.bf16.mxu0 %v2087
    %2591 = vmatpush1.bf16.msra.mxu0 %v2086
    %2592 = vmatprep.subr.bf16.mxu0 %v2147
    %2593 = vmatpush2.bf16.msra.mxu0 %v2146
    %2594 = vmatprep.subr.bf16.mxu0 %v2143
    %2595 = vmatpush2.bf16.msra.mxu0 %v2142
    %2596 = vmatprep.subr.bf16.mxu0 %v2139
    %2597 = vmatpush2.bf16.msra.mxu0 %v2138
    %2598 = vmatprep.subr.bf16.mxu0 %v2135
    %2599 = vmatpush2.bf16.msra.mxu0 %v2134
    %2600 = vmatprep.subr.bf16.mxu0 %v2131
    %2601 = vmatpush2.bf16.msra.mxu0 %v2130
    %2602 = vmatprep.subr.bf16.mxu0 %v2127
    %2603 = vmatpush2.bf16.msra.mxu0 %v2126
    %2604 = vmatprep.subr.bf16.mxu0 %v2123
    %2605 = vmatpush2.bf16.msra.mxu0 %v2122
    %2606 = vmatprep.subr.bf16.mxu0 %v2119
    %2607 = vmatpush2.bf16.msra.mxu0 %v2118
    %2608 = vmatprep.mubr.bf16.mxu0 %v1227
    %2609 = vmatmul.mubr.bf16.gmra.mxu0 %v1226
    %v2610 = vpop.f32.mrf.mxu0
    %v2611 = vadd.f32 %v2568, %v2610
    %v2612 = vpop.f32.mrf.mxu0
    %v2613 = vadd.f32 %v2570, %v2612
    %v2614 = vpop.f32.mrf.mxu0
    %v2615 = vadd.f32 %v2572, %v2614
    %v2616 = vpop.f32.mrf.mxu0
    %v2617 = vadd.f32 %v2574, %v2616
    %2618 = vdwg.mxu0
    %2619 = vmatprep.subr.bf16.mxu0 %v2179
    %2620 = vmatpush1.bf16.msra.mxu0 %v2178
    %2621 = vmatprep.subr.bf16.mxu0 %v2175
    %2622 = vmatpush1.bf16.msra.mxu0 %v2174
    %2623 = vmatprep.subr.bf16.mxu0 %v2171
    %2624 = vmatpush1.bf16.msra.mxu0 %v2170
    %2625 = vmatprep.subr.bf16.mxu0 %v2167
    %2626 = vmatpush1.bf16.msra.mxu0 %v2166
    %2627 = vmatprep.subr.bf16.mxu0 %v2163
    %2628 = vmatpush1.bf16.msra.mxu0 %v2162
    %2629 = vmatprep.subr.bf16.mxu0 %v2159
    %2630 = vmatpush1.bf16.msra.mxu0 %v2158
    %2631 = vmatprep.subr.bf16.mxu0 %v2155
    %2632 = vmatpush1.bf16.msra.mxu0 %v2154
    %2633 = vmatprep.subr.bf16.mxu0 %v2151
    %2634 = vmatpush1.bf16.msra.mxu0 %v2150
    %2635 = vmatprep.subr.bf16.mxu0 %v2211
    %2636 = vmatpush2.bf16.msra.mxu0 %v2210
    %2637 = vmatprep.subr.bf16.mxu0 %v2207
    %2638 = vmatpush2.bf16.msra.mxu0 %v2206
    %2639 = vmatprep.subr.bf16.mxu0 %v2203
    %2640 = vmatpush2.bf16.msra.mxu0 %v2202
    %2641 = vmatprep.subr.bf16.mxu0 %v2199
    %2642 = vmatpush2.bf16.msra.mxu0 %v2198
    %2643 = vmatprep.subr.bf16.mxu0 %v2195
    %2644 = vmatpush2.bf16.msra.mxu0 %v2194
    %2645 = vmatprep.subr.bf16.mxu0 %v2191
    %2646 = vmatpush2.bf16.msra.mxu0 %v2190
    %2647 = vmatprep.subr.bf16.mxu0 %v2187
    %2648 = vmatpush2.bf16.msra.mxu0 %v2186
    %2649 = vmatprep.subr.bf16.mxu0 %v2183
    %2650 = vmatpush2.bf16.msra.mxu0 %v2182
    %2651 = vmatprep.mubr.bf16.mxu0 %v1229
    %2652 = vmatmul.mubr.bf16.gmra.mxu0 %v1228
    %v2653 = vpop.f32.mrf.mxu0
    %v2654 = vadd.f32 %v2611, %v2653
    %v2655 = vpop.f32.mrf.mxu0
    %v2656 = vadd.f32 %v2613, %v2655
    %v2657 = vpop.f32.mrf.mxu0
    %v2658 = vadd.f32 %v2615, %v2657
    %v2659 = vpop.f32.mrf.mxu0
    %v2660 = vadd.f32 %v2617, %v2659
    %2661 = vdwg.mxu0
    %vm2662 = vcmp.ge.f32.partialorder %v2525, 0.0
    %vm2663 = vcmp.ge.f32.partialorder %v2527, 0.0
    %vm2664 = vcmp.ge.f32.partialorder %v2654, 0.0
    %vm2665 = vcmp.ge.f32.partialorder %v2656, 0.0
    %vm2666 = vcmp.ge.f32.partialorder %v2529, 0.0
    %vm2667 = vcmp.ge.f32.partialorder %v2531, 0.0
    %vm2668 = vcmp.ge.f32.partialorder %v2658, 0.0
    %vm2669 = vcmp.ge.f32.partialorder %v2660, 0.0
    %v2670 = vstv %s1199
    %v2671 = vmul.f32 %v2670, %v2525
    %v2672 = vmul.f32 %v2670, %v2527
    %v2673 = vmul.f32 %v2670, %v2654
    %v2674 = vmul.f32 %v2670, %v2656
    %v2675 = vmul.f32 %v2670, %v2529
    %v2676 = vmul.f32 %v2670, %v2531
    %v2677 = vmul.f32 %v2670, %v2658
    %v2678 = vmul.f32 %v2670, %v2660
    %v2679 = vsel %vm2662, %v2525, %v2671
    %v2680 = vsel %vm2663, %v2527, %v2672
    %v2681 = vsel %vm2664, %v2654, %v2673
    %v2682 = vsel %vm2665, %v2656, %v2674
    %v2683 = vsel %vm2666, %v2529, %v2675
    %v2684 = vsel %vm2667, %v2531, %v2676
    %v2685 = vsel %vm2668, %v2658, %v2677
    %v2686 = vsel %vm2669, %v2660, %v2678
    %v2687 = vld [vmem:[#allocation6] sm:$0x3]
    %vm2688 = vcmask 130048
    %v2690 = vsel %vm2688, %v2687, 0
    %2692 = vmatprep.subr.mxu0 0.0
    %2693 = vmatpush1.msra.mxu0 0.0
    %2694 = vmatprep.subr.mxu0 0.0
    %2695 = vmatpush1.msra.mxu0 0.0
    %2696 = vmatprep.subr.mxu0 0.0
    %2697 = vmatpush1.msra.mxu0 0.0
    %2698 = vmatprep.subr.mxu0 0.0
    %2699 = vmatpush1.msra.mxu0 0.0
    %2700 = vmatprep.subr.mxu0 0.0
    %2701 = vmatpush1.msra.mxu0 0.0
    %2702 = vmatprep.subr.mxu0 0.0
    %2703 = vmatpush1.msra.mxu0 0.0
    %2704 = vmatprep.subr.mxu0 0.0
    %2705 = vmatpush1.msra.mxu0 0.0
    %2706 = vmatprep.subr.mxu0 0.0
    %2707 = vmatpush1.msra.mxu0 0.0
    %2708 = vmatprep.subr.mxu0 0.0
    %2709 = vmatpush1.msra.mxu0 0.0
    %2710 = vmatprep.subr.mxu0 0.0
    %2711 = vmatpush1.msra.mxu0 0.0
    %2712 = vmatprep.subr.mxu0 0.0
    %2713 = vmatpush1.msra.mxu0 0.0
    %2714 = vmatprep.subr.mxu0 0.0
    %2715 = vmatpush1.msra.mxu0 0.0
    %2716 = vmatprep.subr.mxu0 0.0
    %2717 = vmatpush1.msra.mxu0 0.0
    %2718 = vmatprep.subr.mxu0 0.0
    %2719 = vmatpush1.msra.mxu0 0.0
    %2720 = vmatprep.subr.mxu0 %v2684
    %2721 = vmatpush1.msra.mxu0 %v2683
    %2722 = vmatprep.subr.mxu0 %v2680
    %2723 = vmatpush1.msra.mxu0 %v2679
    %2724 = vmatprep.subr.mxu0 0.0
    %2725 = vmatpush2.msra.mxu0 0.0
    %2726 = vmatprep.subr.mxu0 0.0
    %2727 = vmatpush2.msra.mxu0 0.0
    %2728 = vmatprep.subr.mxu0 0.0
    %2729 = vmatpush2.msra.mxu0 0.0
    %2730 = vmatprep.subr.mxu0 0.0
    %2731 = vmatpush2.msra.mxu0 0.0
    %2732 = vmatprep.subr.mxu0 0.0
    %2733 = vmatpush2.msra.mxu0 0.0
    %2734 = vmatprep.subr.mxu0 0.0
    %2735 = vmatpush2.msra.mxu0 0.0
    %2736 = vmatprep.subr.mxu0 0.0
    %2737 = vmatpush2.msra.mxu0 0.0
    %2738 = vmatprep.subr.mxu0 0.0
    %2739 = vmatpush2.msra.mxu0 0.0
    %2740 = vmatprep.subr.mxu0 0.0
    %2741 = vmatpush2.msra.mxu0 0.0
    %2742 = vmatprep.subr.mxu0 0.0
    %2743 = vmatpush2.msra.mxu0 0.0
    %2744 = vmatprep.subr.mxu0 0.0
    %2745 = vmatpush2.msra.mxu0 0.0
    %2746 = vmatprep.subr.mxu0 0.0
    %2747 = vmatpush2.msra.mxu0 0.0
    %2748 = vmatprep.subr.mxu0 0.0
    %2749 = vmatpush2.msra.mxu0 0.0
    %2750 = vmatprep.subr.mxu0 0.0
    %2751 = vmatpush2.msra.mxu0 0.0
    %2752 = vmatprep.subr.mxu0 0.0
    %2753 = vmatpush2.msra.mxu0 0.0
    %2754 = vmatprep.subr.mxu0 0.0
    %2755 = vmatpush2.msra.mxu0 0.0
    %2756 = vmatprep.mubr.f32.mxu0 0.0
    %2757 = vmatmul.mubr.f32.gmra.mxu0 %v2690
    %v2758 = vpop.f32.mrf.mxu0
    %v2759 = vadd.f32 0.0, %v2758
    %v2760 = vpop.f32.mrf.mxu0
    %v2761 = vadd.f32 0.0, %v2760
    %2762 = vdwg.mxu0
    %2763 = vmatprep.subr.mxu0 0.0
    %2764 = vmatpush1.msra.mxu0 0.0
    %2765 = vmatprep.subr.mxu0 0.0
    %2766 = vmatpush1.msra.mxu0 0.0
    %2767 = vmatprep.subr.mxu0 0.0
    %2768 = vmatpush1.msra.mxu0 0.0
    %2769 = vmatprep.subr.mxu0 0.0
    %2770 = vmatpush1.msra.mxu0 0.0
    %2771 = vmatprep.subr.mxu0 0.0
    %2772 = vmatpush1.msra.mxu0 0.0
    %2773 = vmatprep.subr.mxu0 0.0
    %2774 = vmatpush1.msra.mxu0 0.0
    %2775 = vmatprep.subr.mxu0 0.0
    %2776 = vmatpush1.msra.mxu0 0.0
    %2777 = vmatprep.subr.mxu0 0.0
    %2778 = vmatpush1.msra.mxu0 0.0
    %2779 = vmatprep.subr.mxu0 0.0
    %2780 = vmatpush1.msra.mxu0 0.0
    %2781 = vmatprep.subr.mxu0 0.0
    %2782 = vmatpush1.msra.mxu0 0.0
    %2783 = vmatprep.subr.mxu0 0.0
    %2784 = vmatpush1.msra.mxu0 0.0
    %2785 = vmatprep.subr.mxu0 0.0
    %2786 = vmatpush1.msra.mxu0 0.0
    %2787 = vmatprep.subr.mxu0 0.0
    %2788 = vmatpush1.msra.mxu0 0.0
    %2789 = vmatprep.subr.mxu0 0.0
    %2790 = vmatpush1.msra.mxu0 0.0
    %2791 = vmatprep.subr.mxu0 %v2686
    %2792 = vmatpush1.msra.mxu0 %v2685
    %2793 = vmatprep.subr.mxu0 %v2682
    %2794 = vmatpush1.msra.mxu0 %v2681
    %2795 = vmatprep.subr.mxu0 0.0
    %2796 = vmatpush2.msra.mxu0 0.0
    %2797 = vmatprep.subr.mxu0 0.0
    %2798 = vmatpush2.msra.mxu0 0.0
    %2799 = vmatprep.subr.mxu0 0.0
    %2800 = vmatpush2.msra.mxu0 0.0
    %2801 = vmatprep.subr.mxu0 0.0
    %2802 = vmatpush2.msra.mxu0 0.0
    %2803 = vmatprep.subr.mxu0 0.0
    %2804 = vmatpush2.msra.mxu0 0.0
    %2805 = vmatprep.subr.mxu0 0.0
    %2806 = vmatpush2.msra.mxu0 0.0
    %2807 = vmatprep.subr.mxu0 0.0
    %2808 = vmatpush2.msra.mxu0 0.0
    %2809 = vmatprep.subr.mxu0 0.0
    %2810 = vmatpush2.msra.mxu0 0.0
    %2811 = vmatprep.subr.mxu0 0.0
    %2812 = vmatpush2.msra.mxu0 0.0
    %2813 = vmatprep.subr.mxu0 0.0
    %2814 = vmatpush2.msra.mxu0 0.0
    %2815 = vmatprep.subr.mxu0 0.0
    %2816 = vmatpush2.msra.mxu0 0.0
    %2817 = vmatprep.subr.mxu0 0.0
    %2818 = vmatpush2.msra.mxu0 0.0
    %2819 = vmatprep.subr.mxu0 0.0
    %2820 = vmatpush2.msra.mxu0 0.0
    %2821 = vmatprep.subr.mxu0 0.0
    %2822 = vmatpush2.msra.mxu0 0.0
    %2823 = vmatprep.subr.mxu0 0.0
    %2824 = vmatpush2.msra.mxu0 0.0
    %2825 = vmatprep.subr.mxu0 0.0
    %2826 = vmatpush2.msra.mxu0 0.0
    %2827 = vmatprep.mubr.f32.mxu0 0.0
    %2828 = vmatmul.mubr.f32.gmra.mxu0 %v2690
    %v2829 = vpop.f32.mrf.mxu0
    %v2830 = vadd.f32 0.0, %v2829
    %v2831 = vpop.f32.mrf.mxu0
    %v2832 = vadd.f32 0.0, %v2831
    %2833 = vdwg.mxu0
    %v2838 = vcombine.low %v2759, %v2761
    %v2839 = vcombine.low %v2830, %v2832
    %v2841 = vunpack.c.l.s4 1983009808
    %v2842 = vunpack.c.0.s8 %v2841
    %v2843 = vlaneseq
    %v2844 = vshrl.u32 %v2843, 7
    %v2845 = vsub.s32 %v2842, %v2844
    %v2846 = vrot.slane %v2838, %v2845
    %v2848 = vunpack.c.l.s4 1983009808
    %v2849 = vunpack.c.0.s8 %v2848
    %v2850 = vlaneseq
    %v2851 = vshrl.u32 %v2850, 7
    %v2852 = vsub.s32 %v2849, %v2851
    %v2853 = vrot.slane %v2839, %v2852
    %v2854 = vcombine.low %v2846, %v2853
    %2856 = vst [vmem:[#allocation15] sm:$0xff] %v2854
    // Predicated region
    $region74: #{tpu_custom_call.1} parent=1 // pred_check
      _
    $region75: #{tpu_custom_call.1} parent=1 // pred_check_branch
      %2858 = sbr.rel (0) target = $region77
    $region76: #{tpu_custom_call.1} parent=1 // pred_region
      %s2860 = ssub.s32 128, 128
      %2861 = vsyncadd [#allocation4], %s2860
      %s2863 = sshll.u32 [#allocation15], 4
      %s2864 = int_to_ptr.vmem [resolvable:$true] %s2863
      %2866 = dma.vmem_to_hbm [thread:$0]  %s2864, 128, %s11, [#allocation4]
    $region77: #{tpu_custom_call.1} parent=1 // pred_fallthru
      _
    // Predicated region
    $region78: #{tpu_custom_call.1} parent=1 // pred_check
      _
    $region79: #{tpu_custom_call.1} parent=1 // pred_check_branch
      %2868 = sbr.rel (0) target = $region81
    $region80: #{tpu_custom_call.1} parent=1 // pred_region
      %2869 = dma.done [#allocation4], 128
    $region81: #{tpu_custom_call.1} parent=1 // pred_fallthru
      _
    %2870 = vsyncpa [#allocation3], 1
    %2871 = vsyncpa [#allocation7], 1
    %2872 = vsyncpa [#allocation10], 1
    %2873 = vsyncpa [#allocation13], 1
    %2874 = vsyncpa [#allocation4], 1
    %2875 = vsyncpa [#allocation5], 1

</llo_original>
